<compile_context>
chip_gen: v7x
topology: tpu7x:2x2x1
jax: 0.10.0
libtpu: 0.0.40
codegen_flags: <defaults>
</compile_context>

<pallas_src>
import functools

import jax
import jax.numpy as jnp
from jax import lax
from jax.experimental import pallas as pl
from jax.experimental.pallas import tpu as pltpu

EPS = 1e-5


# --------------------------------------------------------------------------
# Wrapper-side layout helper: +1 spatial halo pad and polyphase split.
# --------------------------------------------------------------------------
def _make_phases(x_nhwc, stride):
    """Pad by 1 (halo) and split into stride*stride polyphase components.

    Returns xph of shape (N*stride*stride, Hph, Wph, C), image-major /
    phase-minor, with
        xph[n*s*s + rh*s + rw, i, j, c] == xpad[n, i*s + rh, j*s + rw, c]
    so a stride-s 3x3 tap (kh, kw) becomes a UNIT-STRIDE slice of phase
    (kh % s, kw % s) offset by (kh // s, kw // s).  For stride == 1 this is
    just the padded image with a singleton phase axis.
    """
    N, H, W, C = x_nhwc.shape
    s = stride
    Hp, Wp = H + 2, W + 2
    Hph, Wph = -(-Hp // s), -(-Wp // s)        # ceil division
    xp = jnp.pad(x_nhwc, ((0, 0),
                          (1, 1 + Hph * s - Hp),
                          (1, 1 + Wph * s - Wp),
                          (0, 0)))
    xph = xp.reshape(N, Hph, s, Wph, s, C)
    xph = jnp.transpose(xph, (0, 2, 4, 1, 3, 5)).reshape(N * s * s, Hph, Wph, C)
    return xph, Hph, Wph


# --------------------------------------------------------------------------
# Fused kernel: depthwise 3x3 (VPU, f32) + BN1 shift + ReLU
#               -> pointwise 1x1 as bf16 MXU matmul (f32 acc) + BN2 shift + ReLU.
# One batch image per grid step, processed in row strips.
# --------------------------------------------------------------------------
def _mobile_block_kernel(xph_ref, w1_ref, b1_ref, w2_ref, b2_ref, o_ref,
                         *, Ho, Wo, stride, strip_rows):
    Cin = xph_ref.shape[-1]
    Cout = o_ref.shape[-1]
    s = stride

    # Hoist all parameter loads and the 9 per-tap weight slices out of the strip
    # loop (JAX does not CSE broadcast_in_dim; re-loading per strip wastes vld).
    w1 = w1_ref[...]                     # (3, 3, Cin)  f32, BN1 scale folded in
    b1 = b1_ref[...]                     # (1, 1, Cin)  f32  (BN1 shift)
    w2 = w2_ref[...]                     # (Cin, Cout)  bf16, BN2 scale folded in
    b2 = b2_ref[...]                     # (1, Cout)    f32  (BN2 shift)
    taps = [(kh // s, kw // s, (kh % s) * s + (kw % s), w1[kh, kw])
            for kh in range(3) for kw in range(3)]

    def do_strip(row0, rows):
        # ---- depthwise 3x3 at OUTPUT resolution (stride folded into the
        #      polyphase input => unit-stride slices only), f32 VPU accumulate.
        acc = None
        for qh, qw, p, w_tap in taps:
            tap = xph_ref[p, pl.ds(row0 + qh, rows), pl.ds(qw, Wo), :]
            contrib = tap * w_tap
            acc = contrib if acc is None else acc + contrib
        hid = jnp.maximum(acc + b1, 0.0)                  # BN1 shift + ReLU

        # ---- pointwise 1x1 conv: bf16 MXU matmul, f32 accumulation.
        y = jnp.dot(hid.reshape(rows * Wo, Cin).astype(jnp.bfloat16), w2,
                    preferred_element_type=jnp.float32)   # (rows*Wo, Cout)
        y = jnp.maximum(y + b2, 0.0)                      # BN2 shift + ReLU
        o_ref[0, pl.ds(row0, rows), :, :] = (
            y.reshape(rows, Wo, Cout).astype(o_ref.dtype))

    n_full = Ho // strip_rows
    rem = Ho - n_full * strip_rows
    if n_full > 0:
        def strip_body(t, carry):
            do_strip(t * strip_rows, strip_rows)
            return carry
        lax.fori_loop(0, n_full, strip_body, 0)
    if rem > 0:                                           # static epilogue strip
        do_strip(n_full * strip_rows, rem)


# --------------------------------------------------------------------------
# MobileBlock forward (NCHW in/out, PyTorch-shaped params).
# --------------------------------------------------------------------------
@functools.partial(jax.jit, static_argnames=("stride",))
def mobile_block_forward(x_nchw, params, stride=1):
    N, Cin, H, W = x_nchw.shape
    Cout = params["conv2_w"].shape[0]
    s = int(stride)
    Ho = (H - 1) // s + 1                 # PyTorch output size for k=3, pad=1
    Wo = (W - 1) // s + 1

    # ---- fold eval-mode BN into weight scales + per-channel shifts ----
    s1 = params["bn1_gamma"] / jnp.sqrt(params["bn1_var"] + EPS)
    b1 = params["bn1_beta"] - params["bn1_mean"] * s1
    s2 = params["bn2_gamma"] / jnp.sqrt(params["bn2_var"] + EPS)
    b2 = params["bn2_beta"] - params["bn2_mean"] * s2

    # depthwise weight (Cin,1,3,3) -> (3,3,Cin), BN1 scale folded in (f32 VPU path)
    w1 = (jnp.transpose(params["conv1_w"][:, 0, :, :], (1, 2, 0))
          * s1[None, None, :]).astype(jnp.float32)
    b1p = b1.reshape(1, 1, Cin).astype(jnp.float32)
    # pointwise weight (Cout,Cin,1,1) -> (Cin,Cout), BN2 scale folded in, bf16 for MXU
    w2 = (jnp.transpose(params["conv2_w"][:, :, 0, 0], (1, 0))
          * s2[None, :]).astype(jnp.bfloat16)
    b2p = b2.reshape(1, Cout).astype(jnp.float32)

    # ---- layout glue (one fused XLA copy under jit): NCHW -> NHWC, +1 halo,
    #      polyphase split by stride.  Channels intentionally NOT padded to 128:
    #      HBM traffic stays at the true byte count (this block is mem-bound).
    x = jnp.transpose(x_nchw, (0, 2, 3, 1)).astype(jnp.float32)
    xph, Hph, Wph = _make_phases(x, s)

    # Row-strip size: ~256 MXU rows per strip; if Wo is not a multiple of 8 use
    # 8-row strips so M = strip_rows*Wo stays a multiple of 8 (no pre-matmul relayout).
    if Wo % 8 == 0:
        strip_rows = max(1, min(Ho, 256 // Wo))
    else:
        strip_rows = min(Ho, 8)

    kern = functools.partial(_mobile_block_kernel,
                             Ho=Ho, Wo=Wo, stride=s, strip_rows=strip_rows)

    # True (unpadded) cost numbers so XLA scheduling around the kernel isn't skewed.
    flops = int(N * Ho * Wo * Cin * 2 * (9 + Cout))
    bytes_accessed = int(4 * N * (s * s * Hph * Wph * Cin + Ho * Wo * Cout)
                         + 4 * (9 * Cin + Cin + Cout) + 2 * Cin * Cout)

    out = pl.pallas_call(
        kern,
        out_shape=jax.ShapeDtypeStruct((N, Ho, Wo, Cout), jnp.float32),
        grid=(N,),
        in_specs=[
            # one image's polyphase stack per grid step (s*s rows of the lead dim)
            pl.BlockSpec((s * s, Hph, Wph, Cin), lambda n: (n, 0, 0, 0)),
            pl.BlockSpec((3, 3, Cin), lambda n: (0, 0, 0)),      # dw weight (resident)
            pl.BlockSpec((1, 1, Cin), lambda n: (0, 0, 0)),      # BN1 shift
            pl.BlockSpec((Cin, Cout), lambda n: (0, 0)),         # pw weight (resident, bf16)
            pl.BlockSpec((1, Cout), lambda n: (0, 0)),           # BN2 shift
        ],
        out_specs=pl.BlockSpec((1, Ho, Wo, Cout), lambda n: (n, 0, 0, 0)),
        compiler_params=pltpu.CompilerParams(
            dimension_semantics=("parallel",),          # megacore over batch
            vmem_limit_bytes=48 * 1024 * 1024),         # v7x-safe (< 64 MiB physical)
        cost_estimate=pl.CostEstimate(flops=flops, transcendentals=0,
                                      bytes_accessed=bytes_accessed),
    )(xph, w1, b1p, w2, b2p)

    return jnp.transpose(out, (0, 3, 1, 2))             # back to NCHW (module interface)


# --------------------------------------------------------------------------
# Pure-JAX reference (PyTorch semantics, eval-mode BN) for verification.
# --------------------------------------------------------------------------
def reference_forward(x, params, stride=1):
    def bn(y, g, b, m, v):
        return (y - m[None, :, None, None]) / jnp.sqrt(v + EPS)[None, :, None, None] \
               * g[None, :, None, None] + b[None, :, None, None]

    y = lax.conv_general_dilated(
        x, params["conv1_w"], (stride, stride), ((1, 1), (1, 1)),
        dimension_numbers=("NCHW", "OIHW", "NCHW"),
        feature_group_count=x.shape[1])
    y = jnp.maximum(bn(y, params["bn1_gamma"], params["bn1_beta"],
                       params["bn1_mean"], params["bn1_var"]), 0.0)
    y = lax.conv_general_dilated(
        y, params["conv2_w"], (1, 1), ((0, 0), (0, 0)),
        dimension_numbers=("NCHW", "OIHW", "NCHW"))
    y = jnp.maximum(bn(y, params["bn2_gamma"], params["bn2_beta"],
                       params["bn2_mean"], params["bn2_var"]), 0.0)
    return y


def init_params(key, in_channels, out_channels):
    ks = jax.random.split(key, 10)
    return {
        "conv1_w": 0.2 * jax.random.normal(ks[0], (in_channels, 1, 3, 3), jnp.float32),
        "bn1_gamma": 1.0 + 0.1 * jax.random.normal(ks[1], (in_channels,), jnp.float32),
        "bn1_beta": 0.1 * jax.random.normal(ks[2], (in_channels,), jnp.float32),
        "bn1_mean": 0.05 * jax.random.normal(ks[3], (in_channels,), jnp.float32),
        "bn1_var": 1.0 + 0.1 * jax.random.uniform(ks[4], (in_channels,), jnp.float32),
        "conv2_w": 0.2 * jax.random.normal(ks[5], (out_channels, in_channels, 1, 1), jnp.float32),
        "bn2_gamma": 1.0 + 0.1 * jax.random.normal(ks[6], (out_channels,), jnp.float32),
        "bn2_beta": 0.1 * jax.random.normal(ks[7], (out_channels,), jnp.float32),
        "bn2_mean": 0.05 * jax.random.normal(ks[8], (out_channels,), jnp.float32),
        "bn2_var": 1.0 + 0.1 * jax.random.uniform(ks[9], (out_channels,), jnp.float32),
    }


if __name__ == "__main__":
    key = jax.random.PRNGKey(0)
    #           N  Cin Cout   H   W  stride
    configs = [(2,   8,  16,  16, 16, 1),     # basic block
               (2,  16,  32,  16, 16, 2),     # strided block (polyphase path)
               (1,   8,  16,  40, 16, 1)]     # multi-strip loop + epilogue strip
    for idx, (N, Cin, Cout, H, W, stride) in enumerate(configs):
        k_x, k_p = jax.random.split(jax.random.fold_in(key, idx))
        x = jax.random.normal(k_x, (N, Cin, H, W), jnp.float32)   # NCHW like PyTorch
        params = init_params(k_p, Cin, Cout)

        out = jax.block_until_ready(mobile_block_forward(x, params, stride=stride))
        ref = jax.block_until_ready(reference_forward(x, params, stride=stride))

        Ho = (H - 1) // stride + 1
        Wo = (W - 1) // stride + 1
        assert out.shape == ref.shape == (N, Cout, Ho, Wo)
        # bf16 MXU matmul (f32 accumulate) -> tolerance at bf16 level.
        assert jnp.allclose(out, ref, rtol=2e-2, atol=2e-2), (
            f"mismatch cfg{idx}: max abs err {jnp.max(jnp.abs(out - ref))}")
    print("KERNEL_OK")
</pallas_src>

<mosaic_0001>
module attributes {stable_mosaic.version = 11 : i64} {
  func.func @_mobile_block_kernel(%arg0: i32, %arg1: memref<1x18x18x8xf32, #tpu.memory_space<vmem>>, %arg2: memref<3x3x8xf32, #tpu.memory_space<vmem>>, %arg3: memref<1x1x8xf32, #tpu.memory_space<vmem>>, %arg4: memref<8x16xbf16, #tpu.memory_space<vmem>>, %arg5: memref<1x16xf32, #tpu.memory_space<vmem>>, %arg6: memref<1x16x16x16xf32, #tpu.memory_space<vmem>>) attributes {dimension_semantics = [#tpu.dimension_semantics<parallel>], iteration_bounds = array<i64: 2>, scalar_prefetch = 0 : i64, scratch_operands = 0 : i64, tpu.core_type = #tpu.core_type<tc>, window_params = [{transform_indices = @transform_0, window_bounds = array<i64: 1, 18, 18, 8>}, {pipeline_mode = #tpu.pipeline_mode<synchronous>, transform_indices = @transform_1, window_bounds = array<i64: 3, 3, 8>}, {pipeline_mode = #tpu.pipeline_mode<synchronous>, transform_indices = @transform_2, window_bounds = array<i64: 1, 1, 8>}, {pipeline_mode = #tpu.pipeline_mode<synchronous>, transform_indices = @transform_3, window_bounds = array<i64: 8, 16>}, {pipeline_mode = #tpu.pipeline_mode<synchronous>, transform_indices = @transform_4, window_bounds = array<i64: 1, 16>}, {transform_indices = @transform_5, window_bounds = array<i64: 1, 16, 16, 16>}]} {
    %c0 = arith.constant 0 : index
    %c0_0 = arith.constant 0 : index
    %c0_1 = arith.constant 0 : index
    %0 = vector.load %arg2[%c0, %c0_0, %c0_1] : memref<3x3x8xf32, #tpu.memory_space<vmem>>, vector<3x3x8xf32>
    %c0_2 = arith.constant 0 : index
    %c0_3 = arith.constant 0 : index
    %c0_4 = arith.constant 0 : index
    %1 = vector.load %arg3[%c0_2, %c0_3, %c0_4] : memref<1x1x8xf32, #tpu.memory_space<vmem>>, vector<1x1x8xf32>
    %c0_5 = arith.constant 0 : index
    %c0_6 = arith.constant 0 : index
    %2 = vector.load %arg4[%c0_5, %c0_6] : memref<8x16xbf16, #tpu.memory_space<vmem>>, vector<8x16xbf16>
    %c0_7 = arith.constant 0 : index
    %c0_8 = arith.constant 0 : index
    %3 = vector.load %arg5[%c0_7, %c0_8] : memref<1x16xf32, #tpu.memory_space<vmem>>, vector<1x16xf32>
    %4 = vector.extract_strided_slice %0 {offsets = [0, 0, 0], sizes = [1, 1, 8], strides = [1, 1, 1]} : vector<3x3x8xf32> to vector<1x1x8xf32>
    %5 = vector.shape_cast %4 : vector<1x1x8xf32> to vector<8xf32>
    %6 = vector.extract_strided_slice %0 {offsets = [0, 1, 0], sizes = [1, 1, 8], strides = [1, 1, 1]} : vector<3x3x8xf32> to vector<1x1x8xf32>
    %7 = vector.shape_cast %6 : vector<1x1x8xf32> to vector<8xf32>
    %8 = vector.extract_strided_slice %0 {offsets = [0, 2, 0], sizes = [1, 1, 8], strides = [1, 1, 1]} : vector<3x3x8xf32> to vector<1x1x8xf32>
    %9 = vector.shape_cast %8 : vector<1x1x8xf32> to vector<8xf32>
    %10 = vector.extract_strided_slice %0 {offsets = [1, 0, 0], sizes = [1, 1, 8], strides = [1, 1, 1]} : vector<3x3x8xf32> to vector<1x1x8xf32>
    %11 = vector.shape_cast %10 : vector<1x1x8xf32> to vector<8xf32>
    %12 = vector.extract_strided_slice %0 {offsets = [1, 1, 0], sizes = [1, 1, 8], strides = [1, 1, 1]} : vector<3x3x8xf32> to vector<1x1x8xf32>
    %13 = vector.shape_cast %12 : vector<1x1x8xf32> to vector<8xf32>
    %14 = vector.extract_strided_slice %0 {offsets = [1, 2, 0], sizes = [1, 1, 8], strides = [1, 1, 1]} : vector<3x3x8xf32> to vector<1x1x8xf32>
    %15 = vector.shape_cast %14 : vector<1x1x8xf32> to vector<8xf32>
    %16 = vector.extract_strided_slice %0 {offsets = [2, 0, 0], sizes = [1, 1, 8], strides = [1, 1, 1]} : vector<3x3x8xf32> to vector<1x1x8xf32>
    %17 = vector.shape_cast %16 : vector<1x1x8xf32> to vector<8xf32>
    %18 = vector.extract_strided_slice %0 {offsets = [2, 1, 0], sizes = [1, 1, 8], strides = [1, 1, 1]} : vector<3x3x8xf32> to vector<1x1x8xf32>
    %19 = vector.shape_cast %18 : vector<1x1x8xf32> to vector<8xf32>
    %20 = vector.extract_strided_slice %0 {offsets = [2, 2, 0], sizes = [1, 1, 8], strides = [1, 1, 1]} : vector<3x3x8xf32> to vector<1x1x8xf32>
    %21 = vector.shape_cast %20 : vector<1x1x8xf32> to vector<8xf32>
    %c0_i32 = arith.constant 0 : i32
    %c16_i32 = arith.constant 16 : i32
    %22 = arith.muli %c0_i32, %c16_i32 : i32
    %c0_i32_9 = arith.constant 0 : i32
    %23 = arith.addi %22, %c0_i32_9 : i32
    %c0_10 = arith.constant 0 : index
    %24 = arith.index_cast %23 : i32 to index
    %c0_11 = arith.constant 0 : index
    %c0_12 = arith.constant 0 : index
    %25 = vector.load %arg1[%c0_10, %24, %c0_11, %c0_12] : memref<1x18x18x8xf32, #tpu.memory_space<vmem>>, vector<1x16x16x8xf32>
    %26 = vector.shape_cast %25 : vector<1x16x16x8xf32> to vector<16x16x8xf32>
    %27 = vector.shape_cast %5 : vector<8xf32> to vector<1x1x8xf32>
    %28 = vector.broadcast %27 : vector<1x1x8xf32> to vector<16x16x8xf32>
    %29 = arith.mulf %26, %28 : vector<16x16x8xf32>
    %c0_i32_13 = arith.constant 0 : i32
    %30 = arith.addi %22, %c0_i32_13 : i32
    %c0_14 = arith.constant 0 : index
    %31 = arith.index_cast %30 : i32 to index
    %c1 = arith.constant 1 : index
    %c0_15 = arith.constant 0 : index
    %32 = vector.load %arg1[%c0_14, %31, %c1, %c0_15] : memref<1x18x18x8xf32, #tpu.memory_space<vmem>>, vector<1x16x16x8xf32>
    %33 = vector.shape_cast %32 : vector<1x16x16x8xf32> to vector<16x16x8xf32>
    %34 = vector.shape_cast %7 : vector<8xf32> to vector<1x1x8xf32>
    %35 = vector.broadcast %34 : vector<1x1x8xf32> to vector<16x16x8xf32>
    %36 = arith.mulf %33, %35 : vector<16x16x8xf32>
    %37 = arith.addf %29, %36 : vector<16x16x8xf32>
    %c0_i32_16 = arith.constant 0 : i32
    %38 = arith.addi %22, %c0_i32_16 : i32
    %c0_17 = arith.constant 0 : index
    %39 = arith.index_cast %38 : i32 to index
    %c2 = arith.constant 2 : index
    %c0_18 = arith.constant 0 : index
    %40 = vector.load %arg1[%c0_17, %39, %c2, %c0_18] : memref<1x18x18x8xf32, #tpu.memory_space<vmem>>, vector<1x16x16x8xf32>
    %41 = vector.shape_cast %40 : vector<1x16x16x8xf32> to vector<16x16x8xf32>
    %42 = vector.shape_cast %9 : vector<8xf32> to vector<1x1x8xf32>
    %43 = vector.broadcast %42 : vector<1x1x8xf32> to vector<16x16x8xf32>
    %44 = arith.mulf %41, %43 : vector<16x16x8xf32>
    %45 = arith.addf %37, %44 : vector<16x16x8xf32>
    %c1_i32 = arith.constant 1 : i32
    %46 = arith.addi %22, %c1_i32 : i32
    %c0_19 = arith.constant 0 : index
    %47 = arith.index_cast %46 : i32 to index
    %c0_20 = arith.constant 0 : index
    %c0_21 = arith.constant 0 : index
    %48 = vector.load %arg1[%c0_19, %47, %c0_20, %c0_21] : memref<1x18x18x8xf32, #tpu.memory_space<vmem>>, vector<1x16x16x8xf32>
    %49 = vector.shape_cast %48 : vector<1x16x16x8xf32> to vector<16x16x8xf32>
    %50 = vector.shape_cast %11 : vector<8xf32> to vector<1x1x8xf32>
    %51 = vector.broadcast %50 : vector<1x1x8xf32> to vector<16x16x8xf32>
    %52 = arith.mulf %49, %51 : vector<16x16x8xf32>
    %53 = arith.addf %45, %52 : vector<16x16x8xf32>
    %c1_i32_22 = arith.constant 1 : i32
    %54 = arith.addi %22, %c1_i32_22 : i32
    %c0_23 = arith.constant 0 : index
    %55 = arith.index_cast %54 : i32 to index
    %c1_24 = arith.constant 1 : index
    %c0_25 = arith.constant 0 : index
    %56 = vector.load %arg1[%c0_23, %55, %c1_24, %c0_25] : memref<1x18x18x8xf32, #tpu.memory_space<vmem>>, vector<1x16x16x8xf32>
    %57 = vector.shape_cast %56 : vector<1x16x16x8xf32> to vector<16x16x8xf32>
    %58 = vector.shape_cast %13 : vector<8xf32> to vector<1x1x8xf32>
    %59 = vector.broadcast %58 : vector<1x1x8xf32> to vector<16x16x8xf32>
    %60 = arith.mulf %57, %59 : vector<16x16x8xf32>
    %61 = arith.addf %53, %60 : vector<16x16x8xf32>
    %c1_i32_26 = arith.constant 1 : i32
    %62 = arith.addi %22, %c1_i32_26 : i32
    %c0_27 = arith.constant 0 : index
    %63 = arith.index_cast %62 : i32 to index
    %c2_28 = arith.constant 2 : index
    %c0_29 = arith.constant 0 : index
    %64 = vector.load %arg1[%c0_27, %63, %c2_28, %c0_29] : memref<1x18x18x8xf32, #tpu.memory_space<vmem>>, vector<1x16x16x8xf32>
    %65 = vector.shape_cast %64 : vector<1x16x16x8xf32> to vector<16x16x8xf32>
    %66 = vector.shape_cast %15 : vector<8xf32> to vector<1x1x8xf32>
    %67 = vector.broadcast %66 : vector<1x1x8xf32> to vector<16x16x8xf32>
    %68 = arith.mulf %65, %67 : vector<16x16x8xf32>
    %69 = arith.addf %61, %68 : vector<16x16x8xf32>
    %c2_i32 = arith.constant 2 : i32
    %70 = arith.addi %22, %c2_i32 : i32
    %c0_30 = arith.constant 0 : index
    %71 = arith.index_cast %70 : i32 to index
    %c0_31 = arith.constant 0 : index
    %c0_32 = arith.constant 0 : index
    %72 = vector.load %arg1[%c0_30, %71, %c0_31, %c0_32] : memref<1x18x18x8xf32, #tpu.memory_space<vmem>>, vector<1x16x16x8xf32>
    %73 = vector.shape_cast %72 : vector<1x16x16x8xf32> to vector<16x16x8xf32>
    %74 = vector.shape_cast %17 : vector<8xf32> to vector<1x1x8xf32>
    %75 = vector.broadcast %74 : vector<1x1x8xf32> to vector<16x16x8xf32>
    %76 = arith.mulf %73, %75 : vector<16x16x8xf32>
    %77 = arith.addf %69, %76 : vector<16x16x8xf32>
    %c2_i32_33 = arith.constant 2 : i32
    %78 = arith.addi %22, %c2_i32_33 : i32
    %c0_34 = arith.constant 0 : index
    %79 = arith.index_cast %78 : i32 to index
    %c1_35 = arith.constant 1 : index
    %c0_36 = arith.constant 0 : index
    %80 = vector.load %arg1[%c0_34, %79, %c1_35, %c0_36] : memref<1x18x18x8xf32, #tpu.memory_space<vmem>>, vector<1x16x16x8xf32>
    %81 = vector.shape_cast %80 : vector<1x16x16x8xf32> to vector<16x16x8xf32>
    %82 = vector.shape_cast %19 : vector<8xf32> to vector<1x1x8xf32>
    %83 = vector.broadcast %82 : vector<1x1x8xf32> to vector<16x16x8xf32>
    %84 = arith.mulf %81, %83 : vector<16x16x8xf32>
    %85 = arith.addf %77, %84 : vector<16x16x8xf32>
    %c2_i32_37 = arith.constant 2 : i32
    %86 = arith.addi %22, %c2_i32_37 : i32
    %c0_38 = arith.constant 0 : index
    %87 = arith.index_cast %86 : i32 to index
    %c2_39 = arith.constant 2 : index
    %c0_40 = arith.constant 0 : index
    %88 = vector.load %arg1[%c0_38, %87, %c2_39, %c0_40] : memref<1x18x18x8xf32, #tpu.memory_space<vmem>>, vector<1x16x16x8xf32>
    %89 = vector.shape_cast %88 : vector<1x16x16x8xf32> to vector<16x16x8xf32>
    %90 = vector.shape_cast %21 : vector<8xf32> to vector<1x1x8xf32>
    %91 = vector.broadcast %90 : vector<1x1x8xf32> to vector<16x16x8xf32>
    %92 = arith.mulf %89, %91 : vector<16x16x8xf32>
    %93 = arith.addf %85, %92 : vector<16x16x8xf32>
    %94 = vector.broadcast %1 : vector<1x1x8xf32> to vector<16x16x8xf32>
    %95 = arith.addf %93, %94 : vector<16x16x8xf32>
    %cst = arith.constant 0.000000e+00 : f32
    %96 = vector.broadcast %cst : f32 to vector<16x16x8xf32>
    %97 = arith.maximumf %95, %96 : vector<16x16x8xf32>
    %98 = vector.shape_cast %97 : vector<16x16x8xf32> to vector<256x8xf32>
    %99 = arith.truncf %98 : vector<256x8xf32> to vector<256x8xbf16>
    %cst_41 = arith.constant dense<0.000000e+00> : vector<256x16xf32>
    %100 = tpu.matmul %99, %2, %cst_41 {dimension_numbers = #tpu.dot_dimension_numbers<[1], [0], [0], [1], [0, 0, 1, 1], [], []>} : vector<256x8xbf16>, vector<8x16xbf16>, vector<256x16xf32> -> vector<256x16xf32>
    %101 = vector.broadcast %3 : vector<1x16xf32> to vector<256x16xf32>
    %102 = arith.addf %100, %101 : vector<256x16xf32>
    %cst_42 = arith.constant 0.000000e+00 : f32
    %103 = vector.broadcast %cst_42 : f32 to vector<256x16xf32>
    %104 = arith.maximumf %102, %103 : vector<256x16xf32>
    %105 = vector.shape_cast %104 : vector<256x16xf32> to vector<16x16x16xf32>
    %c0_43 = arith.constant 0 : index
    %106 = arith.index_cast %22 : i32 to index
    %c0_44 = arith.constant 0 : index
    %c0_45 = arith.constant 0 : index
    %107 = vector.load %arg6[%c0_43, %106, %c0_44, %c0_45] : memref<1x16x16x16xf32, #tpu.memory_space<vmem>>, vector<1x16x16x16xf32>
    %108 = vector.shape_cast %107 : vector<1x16x16x16xf32> to vector<16x16x16xf32>
    %109 = vector.shape_cast %105 : vector<16x16x16xf32> to vector<1x16x16x16xf32>
    tpu.vector_store %arg6[%c0_43, %106, %c0_44, %c0_45], %109 {strides = array<i32>} : memref<1x16x16x16xf32, #tpu.memory_space<vmem>>, vector<1x16x16x16xf32>,
    %c1_i32_46 = arith.constant 1 : i32
    return
  }
  func.func @transform_0(%arg0: i32) -> (i32, i32, i32, i32) {
    %c0_i32 = arith.constant 0 : i32
    %c0_i32_0 = arith.constant 0 : i32
    %c0_i32_1 = arith.constant 0 : i32
    %c0_i32_2 = arith.constant 0 : i32
    return %arg0, %c0_i32, %c0_i32_0, %c0_i32_1 : i32, i32, i32, i32
  }
  func.func @transform_1(%arg0: i32) -> (i32, i32, i32) {
    %c0_i32 = arith.constant 0 : i32
    %c0_i32_0 = arith.constant 0 : i32
    %c0_i32_1 = arith.constant 0 : i32
    %c0_i32_2 = arith.constant 0 : i32
    return %c0_i32, %c0_i32_0, %c0_i32_1 : i32, i32, i32
  }
  func.func @transform_2(%arg0: i32) -> (i32, i32, i32) {
    %c0_i32 = arith.constant 0 : i32
    %c0_i32_0 = arith.constant 0 : i32
    %c0_i32_1 = arith.constant 0 : i32
    %c0_i32_2 = arith.constant 0 : i32
    return %c0_i32, %c0_i32_0, %c0_i32_1 : i32, i32, i32
  }
  func.func @transform_3(%arg0: i32) -> (i32, i32) {
    %c0_i32 = arith.constant 0 : i32
    %c0_i32_0 = arith.constant 0 : i32
    %c0_i32_1 = arith.constant 0 : i32
    return %c0_i32, %c0_i32_0 : i32, i32
  }
  func.func @transform_4(%arg0: i32) -> (i32, i32) {
    %c0_i32 = arith.constant 0 : i32
    %c0_i32_0 = arith.constant 0 : i32
    %c0_i32_1 = arith.constant 0 : i32
    return %c0_i32, %c0_i32_0 : i32, i32
  }
  func.func @transform_5(%arg0: i32) -> (i32, i32, i32, i32) {
    %c0_i32 = arith.constant 0 : i32
    %c0_i32_0 = arith.constant 0 : i32
    %c0_i32_1 = arith.constant 0 : i32
    %c0_i32_2 = arith.constant 0 : i32
    return %arg0, %c0_i32, %c0_i32_0, %c0_i32_1 : i32, i32, i32, i32
  }
}

</mosaic_0001>

<llo_original>
// kernel: mobile_block_forward.1
$region0: #{mobile_block_forward.1}
  #allocation0 [shape = 'u32[]', space=smem, size = 0x4, offset = 0x4, fixed_abs, tag = 'smem constant byte address 0x4 - core index']
  #allocation1 [shape = 'u32[144,128]{1,0:T(1,128)}', space=vmem, size = 0x12000, scoped, tag = 'internal scratch']
  %s0 = inlined_call_operand.vmem [shape: f32[2,18,18,8], index: 0, kind: input, shape index: {}]
  %s1 = inlined_call_operand.vmem [shape: f32[3,3,8], index: 1, kind: input, shape index: {}]
  %s2 = inlined_call_operand.vmem [shape: f32[1,1,8], index: 2, kind: input, shape index: {}]
  %s3 = inlined_call_operand.vmem [shape: bf16[8,16], index: 3, kind: input, shape index: {}]
  %s4 = inlined_call_operand.vmem [shape: f32[1,16], index: 4, kind: input, shape index: {}]
  %s5 = inlined_call_operand.vmem [shape: f32[2,16,16,16], index: 5, kind: output, shape index: {}]
  %s6 = sld [smem:[#allocation0]]
  $region53: #{mobile_block_forward.1} parent=0
    _
  %s8 = ssub.s32 1, %s6
  %s9 = scalar_select 0, %s8, %s6
  loop: start=0, step=1, limit=4
  $region2: #{mobile_block_forward.1} parent=0 // loop_pre_header
    _
  $region3: #{mobile_block_forward.1} parent=0 // loop_header
    %s11 = sphi 0, %s15
    %p12 = scmp.ge.s32.totalorder %s11, 4
    %s21 = sphi 0, %s23
    %s24 = sphi 0, %s21
    %s25 = sphi 0, %s24
    %s41 = sphi 0, %s25
    %s45 = sphi 0, %s45
    %s47 = sphi 0, %s45
    %s48 = sphi 0, %s47
    %s62 = sphi 0, %s48
    %s66 = sphi 0, %s66
    %s68 = sphi 0, %s66
    %s69 = sphi 0, %s68
    %s83 = sphi 0, %s69
    %s87 = sphi 0, %s87
    %s89 = sphi 0, %s87
    %s90 = sphi 0, %s89
    %s104 = sphi 0, %s90
    %s108 = sphi 0, %s108
    %s110 = sphi 0, %s108
    %s111 = sphi 0, %s110
    %s125 = sphi 0, %s111
    %s131 = sphi 0, %s133
    %s134 = sphi 0, %s131
    %s135 = sphi 0, %s134
    %s151 = sphi 0, %s135
  $region4: #{mobile_block_forward.1} parent=0 // loop_header_branch
    %14 = sbr.rel (%p12) target = $region8
  $region5: #{mobile_block_forward.1} parent=0 // loop_body
    %s16 = ssub.s32 %s11, 1
    %s17 = ssub.s32 %s11, 2
    %s18 = sadd.s32 %s11, 1
    %s19 = ssub.s32 %s11, %s18
    %p20 = scmp.eq.s32.totalorder %s19, 0
    %s22 = sadd.s32 %s21, 1
    %s23 = scalar_select %p20, %s21, %s22
    %p26 = pneg %p20
    %p27 = scmp.eq.s32.totalorder %s11, 1
    %p28 = por %p26, %p27
    %p29 = scmp.ne.s32.totalorder %s21, %s24
    %p30 = scmp.eq.s32.totalorder %s11, 0
    %p31 = por %p29, %p30
    %p32 = scmp.ne.s32.totalorder %s21, %s24
    %p33 = scmp.eq.s32.totalorder %s16, 1
    %p34 = por %p32, %p33
    %p35 = scmp.ne.s32.totalorder %s24, %s25
    %p36 = scmp.eq.s32.totalorder %s16, 0
    %p37 = por %p35, %p36
    %p38 = scmp.ne.s32.totalorder %s24, %s25
    %p39 = scmp.eq.s32.totalorder %s17, 1
    %p40 = por %p38, %p39
    %p42 = scmp.ne.s32.totalorder %s25, %s41
    %p43 = scmp.eq.s32.totalorder %s17, 0
    %p44 = por %p42, %p43
    %s46 = sadd.s32 %s45, 1
    %p49 = scmp.eq.s32.totalorder %s11, 1
    %p50 = scmp.ne.s32.totalorder %s45, %s47
    %p51 = scmp.eq.s32.totalorder %s11, 0
    %p52 = por %p50, %p51
    %p53 = scmp.ne.s32.totalorder %s45, %s47
    %p54 = scmp.eq.s32.totalorder %s16, 1
    %p55 = por %p53, %p54
    %p56 = scmp.ne.s32.totalorder %s47, %s48
    %p57 = scmp.eq.s32.totalorder %s16, 0
    %p58 = por %p56, %p57
    %p59 = scmp.ne.s32.totalorder %s47, %s48
    %p60 = scmp.eq.s32.totalorder %s17, 1
    %p61 = por %p59, %p60
    %p63 = scmp.ne.s32.totalorder %s48, %s62
    %p64 = scmp.eq.s32.totalorder %s17, 0
    %p65 = por %p63, %p64
    %s67 = sadd.s32 %s66, 1
    %p70 = scmp.eq.s32.totalorder %s11, 1
    %p71 = scmp.ne.s32.totalorder %s66, %s68
    %p72 = scmp.eq.s32.totalorder %s11, 0
    %p73 = por %p71, %p72
    %p74 = scmp.ne.s32.totalorder %s66, %s68
    %p75 = scmp.eq.s32.totalorder %s16, 1
    %p76 = por %p74, %p75
    %p77 = scmp.ne.s32.totalorder %s68, %s69
    %p78 = scmp.eq.s32.totalorder %s16, 0
    %p79 = por %p77, %p78
    %p80 = scmp.ne.s32.totalorder %s68, %s69
    %p81 = scmp.eq.s32.totalorder %s17, 1
    %p82 = por %p80, %p81
    %p84 = scmp.ne.s32.totalorder %s69, %s83
    %p85 = scmp.eq.s32.totalorder %s17, 0
    %p86 = por %p84, %p85
    %s88 = sadd.s32 %s87, 1
    %p91 = scmp.eq.s32.totalorder %s11, 1
    %p92 = scmp.ne.s32.totalorder %s87, %s89
    %p93 = scmp.eq.s32.totalorder %s11, 0
    %p94 = por %p92, %p93
    %p95 = scmp.ne.s32.totalorder %s87, %s89
    %p96 = scmp.eq.s32.totalorder %s16, 1
    %p97 = por %p95, %p96
    %p98 = scmp.ne.s32.totalorder %s89, %s90
    %p99 = scmp.eq.s32.totalorder %s16, 0
    %p100 = por %p98, %p99
    %p101 = scmp.ne.s32.totalorder %s89, %s90
    %p102 = scmp.eq.s32.totalorder %s17, 1
    %p103 = por %p101, %p102
    %p105 = scmp.ne.s32.totalorder %s90, %s104
    %p106 = scmp.eq.s32.totalorder %s17, 0
    %p107 = por %p105, %p106
    %s109 = sadd.s32 %s108, 1
    %p112 = scmp.eq.s32.totalorder %s11, 1
    %p113 = scmp.ne.s32.totalorder %s108, %s110
    %p114 = scmp.eq.s32.totalorder %s11, 0
    %p115 = por %p113, %p114
    %p116 = scmp.ne.s32.totalorder %s108, %s110
    %p117 = scmp.eq.s32.totalorder %s16, 1
    %p118 = por %p116, %p117
    %p119 = scmp.ne.s32.totalorder %s110, %s111
    %p120 = scmp.eq.s32.totalorder %s16, 0
    %p121 = por %p119, %p120
    %p122 = scmp.ne.s32.totalorder %s110, %s111
    %p123 = scmp.eq.s32.totalorder %s17, 1
    %p124 = por %p122, %p123
    %p126 = scmp.ne.s32.totalorder %s111, %s125
    %p127 = scmp.eq.s32.totalorder %s17, 0
    %p128 = por %p126, %p127
    %s129 = ssub.s32 %s11, %s18
    %p130 = scmp.eq.s32.totalorder %s129, 0
    %s132 = sadd.s32 %s131, 1
    %s133 = scalar_select %p130, %s131, %s132
    %p136 = pneg %p130
    %p137 = scmp.eq.s32.totalorder %s11, 1
    %p138 = por %p136, %p137
    %p139 = scmp.ne.s32.totalorder %s131, %s134
    %p140 = scmp.eq.s32.totalorder %s11, 0
    %p141 = por %p139, %p140
    %p142 = scmp.ne.s32.totalorder %s131, %s134
    %p143 = scmp.eq.s32.totalorder %s16, 1
    %p144 = por %p142, %p143
    %p145 = scmp.ne.s32.totalorder %s134, %s135
    %p146 = scmp.eq.s32.totalorder %s16, 0
    %p147 = por %p145, %p146
    %p148 = scmp.ne.s32.totalorder %s134, %s135
    %p149 = scmp.eq.s32.totalorder %s17, 1
    %p150 = por %p148, %p149
    %p152 = scmp.ne.s32.totalorder %s135, %s151
    %p153 = scmp.eq.s32.totalorder %s17, 0
    %p154 = por %p152, %p153
    %p155 = scmp.le.s32.totalorder 1, %s11
    %p156 = scmp.lt.s32.totalorder %s11, 3
    %p157 = pnand %p155, %p156
    %p158 = pneg %p157
    // Predicated region
    $region9: #{mobile_block_forward.1} parent=5 // pred_check
      _
    $region10: #{mobile_block_forward.1} parent=5 // pred_check_branch
      %160 = sbr.rel (%p157) target = $region12
    $region11: #{mobile_block_forward.1} parent=5 // pred_region
      %s161 = ssub.s32 %s11, 1
      // Predicated region
      $region13: #{mobile_block_forward.1} parent=11 // pred_check
        %p162 = pneg %p58
      $region14: #{mobile_block_forward.1} parent=11 // pred_check_branch
        %164 = sbr.rel (%p162) target = $region16
      $region15: #{mobile_block_forward.1} parent=11 // pred_region
        _
      $region16: #{mobile_block_forward.1} parent=11 // pred_fallthru
        _
      // Predicated region
      $region17: #{mobile_block_forward.1} parent=11 // pred_check
        %p165 = pneg %p79
      $region18: #{mobile_block_forward.1} parent=11 // pred_check_branch
        %167 = sbr.rel (%p165) target = $region20
      $region19: #{mobile_block_forward.1} parent=11 // pred_region
        _
      $region20: #{mobile_block_forward.1} parent=11 // pred_fallthru
        _
      // Predicated region
      $region21: #{mobile_block_forward.1} parent=11 // pred_check
        %p168 = pneg %p100
      $region22: #{mobile_block_forward.1} parent=11 // pred_check_branch
        %170 = sbr.rel (%p168) target = $region24
      $region23: #{mobile_block_forward.1} parent=11 // pred_region
        _
      $region24: #{mobile_block_forward.1} parent=11 // pred_fallthru
        _
      // Predicated region
      $region25: #{mobile_block_forward.1} parent=11 // pred_check
        %p171 = pneg %p121
      $region26: #{mobile_block_forward.1} parent=11 // pred_check_branch
        %173 = sbr.rel (%p171) target = $region28
      $region27: #{mobile_block_forward.1} parent=11 // pred_region
        _
      $region28: #{mobile_block_forward.1} parent=11 // pred_fallthru
        _
    $region12: #{mobile_block_forward.1} parent=5 // pred_fallthru
      _
    %p174 = scmp.lt.s32.totalorder %s11, 2
    // Predicated region
    $region29: #{mobile_block_forward.1} parent=5 // pred_check
      %p175 = pneg %p174
    $region30: #{mobile_block_forward.1} parent=5 // pred_check_branch
      %177 = sbr.rel (%p175) target = $region32
    $region31: #{mobile_block_forward.1} parent=5 // pred_region
      // Predicated region
      $region33: #{mobile_block_forward.1} parent=31 // pred_check
        %p178 = pneg %p31
      $region34: #{mobile_block_forward.1} parent=31 // pred_check_branch
        %180 = sbr.rel (%p178) target = $region36
      $region35: #{mobile_block_forward.1} parent=31 // pred_region
        %p181 = scmp.lt.s32.totalorder %s11, 1
        %s182 = scalar_select %p181, %s11, 1
        %s183 = smul.addr %s182, 54
        %s184 = smul.addr %s183, 8
        %s185 = scalar_lea.vmem %s0, %s184
      $region36: #{mobile_block_forward.1} parent=31 // pred_fallthru
        _
    $region32: #{mobile_block_forward.1} parent=5 // pred_fallthru
      _
    %p186 = scmp.le.s32.totalorder 1, %s11
    %p187 = scmp.lt.s32.totalorder %s11, 3
    %p188 = pnand %p186, %p187
    %p189 = pneg %p188
    // Predicated region
    $region37: #{mobile_block_forward.1} parent=5 // pred_check
      _
    $region38: #{mobile_block_forward.1} parent=5 // pred_check_branch
      %191 = sbr.rel (%p188) target = $region40
    $region39: #{mobile_block_forward.1} parent=5 // pred_region
      %s192 = ssub.s32 %s11, 1
      %p193 = scmp.lt.s32.totalorder %s16, 1
      %s194 = scalar_select %p193, %s16, 1
      %s195 = smul.addr %s194, 54
      %s196 = smul.addr %s195, 8
      %s197 = scalar_lea.vmem %s0, %s196
      %p198 = pneg %p37
      %p199 = pneg %p34
      %p200 = pneg %p58
      %p201 = pneg %p55
      %p202 = pneg %p79
      %p203 = pneg %p76
      %p204 = pneg %p100
      %p205 = pneg %p97
      %p206 = pneg %p121
      %p207 = pneg %p118
      %p208 = pneg %p147
      %p209 = pneg %p144
      %p210 = scmp.lt.s32.totalorder %s16, 1
      %s211 = scalar_select %p210, %s16, 1
      %s212 = smul.addr %s211, 32
      %s213 = smul.addr %s212, 8
      %s214 = scalar_lea.vmem %s5, %s213
      %p215 = scmp.lt.s32.totalorder %s16, 1
      %s216 = scalar_select %p215, %s16, 1
      %s217 = smul.addr %s216, 54
      %s218 = smul.addr %s217, 8
      %s219 = scalar_lea.vmem %s0, %s218
      %p220 = scmp.lt.s32.totalorder %s16, 1
      %s221 = scalar_select %p220, %s16, 1
      %s222 = smul.addr %s221, 32
      %s223 = smul.addr %s222, 8
      %s224 = scalar_lea.vmem %s5, %s223
      %v226 = vld [vmem:[%s1] sm:$0x7]
      %v227 = vld [vmem:[%s1 + $0x4] sm:$0x7]
      %v228 = vld [vmem:[%s1 + $0x8] sm:$0x7]
      %v229 = vld [vmem:[%s2] sm:$0x1]
      %v230 = vld [vmem:[%s3] sm:$0xf]
      %v231 = vld [vmem:[%s4] sm:$0x1]
      %v232 = vld [vmem:[%s219] sm:$0xff]
      %v233 = vld [vmem:[%s219 + $0x8] sm:$0xff]
      %v234 = vld [vmem:[%s219 + $0x18] sm:$0xff]
      %v235 = vld [vmem:[%s219 + $0x20] sm:$0xff]
      %v236 = vld [vmem:[%s219 + $0x30] sm:$0xff]
      %v237 = vld [vmem:[%s219 + $0x38] sm:$0xff]
      %v238 = vld [vmem:[%s219 + $0x48] sm:$0xff]
      %v239 = vld [vmem:[%s219 + $0x50] sm:$0xff]
      %v240 = vld [vmem:[%s219 + $0x60] sm:$0xff]
      %v241 = vld [vmem:[%s219 + $0x68] sm:$0xff]
      %v242 = vld [vmem:[%s219 + $0x78] sm:$0xff]
      %v243 = vld [vmem:[%s219 + $0x80] sm:$0xff]
      %v244 = vld [vmem:[%s219 + $0x90] sm:$0xff]
      %v245 = vld [vmem:[%s219 + $0x98] sm:$0xff]
      %v246 = vld [vmem:[%s219 + $0xa8] sm:$0xff]
      %v247 = vld [vmem:[%s219 + $0xb0] sm:$0xff]
      %v248 = vld [vmem:[%s219 + $0xc0] sm:$0xff]
      %v249 = vld [vmem:[%s219 + $0xc8] sm:$0xff]
      %v250 = vld [vmem:[%s219 + $0xd8] sm:$0xff]
      %v251 = vld [vmem:[%s219 + $0xe0] sm:$0xff]
      %v252 = vld [vmem:[%s219 + $0xf0] sm:$0xff]
      %v253 = vld [vmem:[%s219 + $0xf8] sm:$0xff]
      %v254 = vld [vmem:[%s219 + $0x108] sm:$0xff]
      %v255 = vld [vmem:[%s219 + $0x110] sm:$0xff]
      %v256 = vld [vmem:[%s219 + $0x120] sm:$0xff]
      %v257 = vld [vmem:[%s219 + $0x128] sm:$0xff]
      %v258 = vld [vmem:[%s219 + $0x138] sm:$0xff]
      %v259 = vld [vmem:[%s219 + $0x140] sm:$0xff]
      %v260 = vld [vmem:[%s219 + $0x150] sm:$0xff]
      %v261 = vld [vmem:[%s219 + $0x158] sm:$0xff]
      %v262 = vld [vmem:[%s219 + $0x168] sm:$0xff]
      %v263 = vld [vmem:[%s219 + $0x170] sm:$0xff]
      %v264 = vlaneseq
      %v265 = vshrl.u32 %v264, 7
      %v266 = vsub.s32 0, %v265
      %v267 = vrot.slane %v226, %v266
      %v268 = vmul.f32 %v232, %v267
      %v269 = vmul.f32 %v233, %v267
      %v270 = vmul.f32 %v234, %v267
      %v271 = vmul.f32 %v235, %v267
      %v272 = vmul.f32 %v236, %v267
      %v273 = vmul.f32 %v237, %v267
      %v274 = vmul.f32 %v238, %v267
      %v275 = vmul.f32 %v239, %v267
      %v276 = vmul.f32 %v240, %v267
      %v277 = vmul.f32 %v241, %v267
      %v278 = vmul.f32 %v242, %v267
      %v279 = vmul.f32 %v243, %v267
      %v280 = vmul.f32 %v244, %v267
      %v281 = vmul.f32 %v245, %v267
      %v282 = vmul.f32 %v246, %v267
      %v283 = vmul.f32 %v247, %v267
      %v284 = vmul.f32 %v248, %v267
      %v285 = vmul.f32 %v249, %v267
      %v286 = vmul.f32 %v250, %v267
      %v287 = vmul.f32 %v251, %v267
      %v288 = vmul.f32 %v252, %v267
      %v289 = vmul.f32 %v253, %v267
      %v290 = vmul.f32 %v254, %v267
      %v291 = vmul.f32 %v255, %v267
      %v292 = vmul.f32 %v256, %v267
      %v293 = vmul.f32 %v257, %v267
      %v294 = vmul.f32 %v258, %v267
      %v295 = vmul.f32 %v259, %v267
      %v296 = vmul.f32 %v260, %v267
      %v297 = vmul.f32 %v261, %v267
      %v298 = vmul.f32 %v262, %v267
      %v299 = vmul.f32 %v263, %v267
      %v300 = vld [vmem:[%s219 + $0x1] sm:$0xff]
      %v301 = vld [vmem:[%s219 + $0x9] sm:$0xff]
      %v302 = vld [vmem:[%s219 + $0x19] sm:$0xff]
      %v303 = vld [vmem:[%s219 + $0x21] sm:$0xff]
      %v304 = vld [vmem:[%s219 + $0x31] sm:$0xff]
      %v305 = vld [vmem:[%s219 + $0x39] sm:$0xff]
      %v306 = vld [vmem:[%s219 + $0x49] sm:$0xff]
      %v307 = vld [vmem:[%s219 + $0x51] sm:$0xff]
      %v308 = vld [vmem:[%s219 + $0x61] sm:$0xff]
      %v309 = vld [vmem:[%s219 + $0x69] sm:$0xff]
      %v310 = vld [vmem:[%s219 + $0x79] sm:$0xff]
      %v311 = vld [vmem:[%s219 + $0x81] sm:$0xff]
      %v312 = vld [vmem:[%s219 + $0x91] sm:$0xff]
      %v313 = vld [vmem:[%s219 + $0x99] sm:$0xff]
      %v314 = vld [vmem:[%s219 + $0xa9] sm:$0xff]
      %v315 = vld [vmem:[%s219 + $0xb1] sm:$0xff]
      %v316 = vld [vmem:[%s219 + $0xc1] sm:$0xff]
      %v317 = vld [vmem:[%s219 + $0xc9] sm:$0xff]
      %v318 = vld [vmem:[%s219 + $0xd9] sm:$0xff]
      %v319 = vld [vmem:[%s219 + $0xe1] sm:$0xff]
      %v320 = vld [vmem:[%s219 + $0xf1] sm:$0xff]
      %v321 = vld [vmem:[%s219 + $0xf9] sm:$0xff]
      %v322 = vld [vmem:[%s219 + $0x109] sm:$0xff]
      %v323 = vld [vmem:[%s219 + $0x111] sm:$0xff]
      %v324 = vld [vmem:[%s219 + $0x121] sm:$0xff]
      %v325 = vld [vmem:[%s219 + $0x129] sm:$0xff]
      %v326 = vld [vmem:[%s219 + $0x139] sm:$0xff]
      %v327 = vld [vmem:[%s219 + $0x141] sm:$0xff]
      %v328 = vld [vmem:[%s219 + $0x151] sm:$0xff]
      %v329 = vld [vmem:[%s219 + $0x159] sm:$0xff]
      %v330 = vld [vmem:[%s219 + $0x169] sm:$0xff]
      %v331 = vld [vmem:[%s219 + $0x171] sm:$0xff]
      %v332 = vlaneseq
      %v333 = vshrl.u32 %v332, 7
      %v334 = vsub.s32 1, %v333
      %v335 = vrot.slane %v226, %v334
      %v336 = vmul.f32 %v300, %v335
      %v337 = vmul.f32 %v301, %v335
      %v338 = vmul.f32 %v302, %v335
      %v339 = vmul.f32 %v303, %v335
      %v340 = vmul.f32 %v304, %v335
      %v341 = vmul.f32 %v305, %v335
      %v342 = vmul.f32 %v306, %v335
      %v343 = vmul.f32 %v307, %v335
      %v344 = vmul.f32 %v308, %v335
      %v345 = vmul.f32 %v309, %v335
      %v346 = vmul.f32 %v310, %v335
      %v347 = vmul.f32 %v311, %v335
      %v348 = vmul.f32 %v312, %v335
      %v349 = vmul.f32 %v313, %v335
      %v350 = vmul.f32 %v314, %v335
      %v351 = vmul.f32 %v315, %v335
      %v352 = vmul.f32 %v316, %v335
      %v353 = vmul.f32 %v317, %v335
      %v354 = vmul.f32 %v318, %v335
      %v355 = vmul.f32 %v319, %v335
      %v356 = vmul.f32 %v320, %v335
      %v357 = vmul.f32 %v321, %v335
      %v358 = vmul.f32 %v322, %v335
      %v359 = vmul.f32 %v323, %v335
      %v360 = vmul.f32 %v324, %v335
      %v361 = vmul.f32 %v325, %v335
      %v362 = vmul.f32 %v326, %v335
      %v363 = vmul.f32 %v327, %v335
      %v364 = vmul.f32 %v328, %v335
      %v365 = vmul.f32 %v329, %v335
      %v366 = vmul.f32 %v330, %v335
      %v367 = vmul.f32 %v331, %v335
      %v368 = vadd.f32 %v268, %v336
      %v369 = vadd.f32 %v269, %v337
      %v370 = vadd.f32 %v270, %v338
      %v371 = vadd.f32 %v271, %v339
      %v372 = vadd.f32 %v272, %v340
      %v373 = vadd.f32 %v273, %v341
      %v374 = vadd.f32 %v274, %v342
      %v375 = vadd.f32 %v275, %v343
      %v376 = vadd.f32 %v276, %v344
      %v377 = vadd.f32 %v277, %v345
      %v378 = vadd.f32 %v278, %v346
      %v379 = vadd.f32 %v279, %v347
      %v380 = vadd.f32 %v280, %v348
      %v381 = vadd.f32 %v281, %v349
      %v382 = vadd.f32 %v282, %v350
      %v383 = vadd.f32 %v283, %v351
      %v384 = vadd.f32 %v284, %v352
      %v385 = vadd.f32 %v285, %v353
      %v386 = vadd.f32 %v286, %v354
      %v387 = vadd.f32 %v287, %v355
      %v388 = vadd.f32 %v288, %v356
      %v389 = vadd.f32 %v289, %v357
      %v390 = vadd.f32 %v290, %v358
      %v391 = vadd.f32 %v291, %v359
      %v392 = vadd.f32 %v292, %v360
      %v393 = vadd.f32 %v293, %v361
      %v394 = vadd.f32 %v294, %v362
      %v395 = vadd.f32 %v295, %v363
      %v396 = vadd.f32 %v296, %v364
      %v397 = vadd.f32 %v297, %v365
      %v398 = vadd.f32 %v298, %v366
      %v399 = vadd.f32 %v299, %v367
      %v400 = vld [vmem:[%s219 + $0x2] sm:$0xff]
      %v401 = vld [vmem:[%s219 + $0xa] sm:$0xff]
      %v402 = vld [vmem:[%s219 + $0x1a] sm:$0xff]
      %v403 = vld [vmem:[%s219 + $0x22] sm:$0xff]
      %v404 = vld [vmem:[%s219 + $0x32] sm:$0xff]
      %v405 = vld [vmem:[%s219 + $0x3a] sm:$0xff]
      %v406 = vld [vmem:[%s219 + $0x4a] sm:$0xff]
      %v407 = vld [vmem:[%s219 + $0x52] sm:$0xff]
      %v408 = vld [vmem:[%s219 + $0x62] sm:$0xff]
      %v409 = vld [vmem:[%s219 + $0x6a] sm:$0xff]
      %v410 = vld [vmem:[%s219 + $0x7a] sm:$0xff]
      %v411 = vld [vmem:[%s219 + $0x82] sm:$0xff]
      %v412 = vld [vmem:[%s219 + $0x92] sm:$0xff]
      %v413 = vld [vmem:[%s219 + $0x9a] sm:$0xff]
      %v414 = vld [vmem:[%s219 + $0xaa] sm:$0xff]
      %v415 = vld [vmem:[%s219 + $0xb2] sm:$0xff]
      %v416 = vld [vmem:[%s219 + $0xc2] sm:$0xff]
      %v417 = vld [vmem:[%s219 + $0xca] sm:$0xff]
      %v418 = vld [vmem:[%s219 + $0xda] sm:$0xff]
      %v419 = vld [vmem:[%s219 + $0xe2] sm:$0xff]
      %v420 = vld [vmem:[%s219 + $0xf2] sm:$0xff]
      %v421 = vld [vmem:[%s219 + $0xfa] sm:$0xff]
      %v422 = vld [vmem:[%s219 + $0x10a] sm:$0xff]
      %v423 = vld [vmem:[%s219 + $0x112] sm:$0xff]
      %v424 = vld [vmem:[%s219 + $0x122] sm:$0xff]
      %v425 = vld [vmem:[%s219 + $0x12a] sm:$0xff]
      %v426 = vld [vmem:[%s219 + $0x13a] sm:$0xff]
      %v427 = vld [vmem:[%s219 + $0x142] sm:$0xff]
      %v428 = vld [vmem:[%s219 + $0x152] sm:$0xff]
      %v429 = vld [vmem:[%s219 + $0x15a] sm:$0xff]
      %v430 = vld [vmem:[%s219 + $0x16a] sm:$0xff]
      %v431 = vld [vmem:[%s219 + $0x172] sm:$0xff]
      %v432 = vlaneseq
      %v433 = vshrl.u32 %v432, 7
      %v434 = vsub.s32 2, %v433
      %v435 = vrot.slane %v226, %v434
      %v436 = vmul.f32 %v400, %v435
      %v437 = vmul.f32 %v401, %v435
      %v438 = vmul.f32 %v402, %v435
      %v439 = vmul.f32 %v403, %v435
      %v440 = vmul.f32 %v404, %v435
      %v441 = vmul.f32 %v405, %v435
      %v442 = vmul.f32 %v406, %v435
      %v443 = vmul.f32 %v407, %v435
      %v444 = vmul.f32 %v408, %v435
      %v445 = vmul.f32 %v409, %v435
      %v446 = vmul.f32 %v410, %v435
      %v447 = vmul.f32 %v411, %v435
      %v448 = vmul.f32 %v412, %v435
      %v449 = vmul.f32 %v413, %v435
      %v450 = vmul.f32 %v414, %v435
      %v451 = vmul.f32 %v415, %v435
      %v452 = vmul.f32 %v416, %v435
      %v453 = vmul.f32 %v417, %v435
      %v454 = vmul.f32 %v418, %v435
      %v455 = vmul.f32 %v419, %v435
      %v456 = vmul.f32 %v420, %v435
      %v457 = vmul.f32 %v421, %v435
      %v458 = vmul.f32 %v422, %v435
      %v459 = vmul.f32 %v423, %v435
      %v460 = vmul.f32 %v424, %v435
      %v461 = vmul.f32 %v425, %v435
      %v462 = vmul.f32 %v426, %v435
      %v463 = vmul.f32 %v427, %v435
      %v464 = vmul.f32 %v428, %v435
      %v465 = vmul.f32 %v429, %v435
      %v466 = vmul.f32 %v430, %v435
      %v467 = vmul.f32 %v431, %v435
      %v468 = vadd.f32 %v368, %v436
      %v469 = vadd.f32 %v369, %v437
      %v470 = vadd.f32 %v370, %v438
      %v471 = vadd.f32 %v371, %v439
      %v472 = vadd.f32 %v372, %v440
      %v473 = vadd.f32 %v373, %v441
      %v474 = vadd.f32 %v374, %v442
      %v475 = vadd.f32 %v375, %v443
      %v476 = vadd.f32 %v376, %v444
      %v477 = vadd.f32 %v377, %v445
      %v478 = vadd.f32 %v378, %v446
      %v479 = vadd.f32 %v379, %v447
      %v480 = vadd.f32 %v380, %v448
      %v481 = vadd.f32 %v381, %v449
      %v482 = vadd.f32 %v382, %v450
      %v483 = vadd.f32 %v383, %v451
      %v484 = vadd.f32 %v384, %v452
      %v485 = vadd.f32 %v385, %v453
      %v486 = vadd.f32 %v386, %v454
      %v487 = vadd.f32 %v387, %v455
      %v488 = vadd.f32 %v388, %v456
      %v489 = vadd.f32 %v389, %v457
      %v490 = vadd.f32 %v390, %v458
      %v491 = vadd.f32 %v391, %v459
      %v492 = vadd.f32 %v392, %v460
      %v493 = vadd.f32 %v393, %v461
      %v494 = vadd.f32 %v394, %v462
      %v495 = vadd.f32 %v395, %v463
      %v496 = vadd.f32 %v396, %v464
      %v497 = vadd.f32 %v397, %v465
      %v498 = vadd.f32 %v398, %v466
      %v499 = vadd.f32 %v399, %v467
      %s500 = scalar_lea.vmem %s219, 24
      %v501 = vld [vmem:[%s500] sm:$0xff]
      %v502 = vld [vmem:[%s500 + $0x8] sm:$0xff]
      %v503 = vld [vmem:[%s500 + $0x18] sm:$0xff]
      %v504 = vld [vmem:[%s500 + $0x20] sm:$0xff]
      %v505 = vld [vmem:[%s500 + $0x30] sm:$0xff]
      %v506 = vld [vmem:[%s500 + $0x38] sm:$0xff]
      %v507 = vld [vmem:[%s500 + $0x48] sm:$0xff]
      %v508 = vld [vmem:[%s500 + $0x50] sm:$0xff]
      %v509 = vld [vmem:[%s500 + $0x60] sm:$0xff]
      %v510 = vld [vmem:[%s500 + $0x68] sm:$0xff]
      %v511 = vld [vmem:[%s500 + $0x78] sm:$0xff]
      %v512 = vld [vmem:[%s500 + $0x80] sm:$0xff]
      %v513 = vld [vmem:[%s500 + $0x90] sm:$0xff]
      %v514 = vld [vmem:[%s500 + $0x98] sm:$0xff]
      %v515 = vld [vmem:[%s500 + $0xa8] sm:$0xff]
      %v516 = vld [vmem:[%s500 + $0xb0] sm:$0xff]
      %v517 = vld [vmem:[%s500 + $0xc0] sm:$0xff]
      %v518 = vld [vmem:[%s500 + $0xc8] sm:$0xff]
      %v519 = vld [vmem:[%s500 + $0xd8] sm:$0xff]
      %v520 = vld [vmem:[%s500 + $0xe0] sm:$0xff]
      %v521 = vld [vmem:[%s500 + $0xf0] sm:$0xff]
      %v522 = vld [vmem:[%s500 + $0xf8] sm:$0xff]
      %v523 = vld [vmem:[%s500 + $0x108] sm:$0xff]
      %v524 = vld [vmem:[%s500 + $0x110] sm:$0xff]
      %v525 = vld [vmem:[%s500 + $0x120] sm:$0xff]
      %v526 = vld [vmem:[%s500 + $0x128] sm:$0xff]
      %v527 = vld [vmem:[%s500 + $0x138] sm:$0xff]
      %v528 = vld [vmem:[%s500 + $0x140] sm:$0xff]
      %v529 = vld [vmem:[%s500 + $0x150] sm:$0xff]
      %v530 = vld [vmem:[%s500 + $0x158] sm:$0xff]
      %v531 = vld [vmem:[%s500 + $0x168] sm:$0xff]
      %v532 = vld [vmem:[%s500 + $0x170] sm:$0xff]
      %v533 = vlaneseq
      %v534 = vshrl.u32 %v533, 7
      %v535 = vsub.s32 0, %v534
      %v536 = vrot.slane %v227, %v535
      %v537 = vmul.f32 %v501, %v536
      %v538 = vmul.f32 %v502, %v536
      %v539 = vmul.f32 %v503, %v536
      %v540 = vmul.f32 %v504, %v536
      %v541 = vmul.f32 %v505, %v536
      %v542 = vmul.f32 %v506, %v536
      %v543 = vmul.f32 %v507, %v536
      %v544 = vmul.f32 %v508, %v536
      %v545 = vmul.f32 %v509, %v536
      %v546 = vmul.f32 %v510, %v536
      %v547 = vmul.f32 %v511, %v536
      %v548 = vmul.f32 %v512, %v536
      %v549 = vmul.f32 %v513, %v536
      %v550 = vmul.f32 %v514, %v536
      %v551 = vmul.f32 %v515, %v536
      %v552 = vmul.f32 %v516, %v536
      %v553 = vmul.f32 %v517, %v536
      %v554 = vmul.f32 %v518, %v536
      %v555 = vmul.f32 %v519, %v536
      %v556 = vmul.f32 %v520, %v536
      %v557 = vmul.f32 %v521, %v536
      %v558 = vmul.f32 %v522, %v536
      %v559 = vmul.f32 %v523, %v536
      %v560 = vmul.f32 %v524, %v536
      %v561 = vmul.f32 %v525, %v536
      %v562 = vmul.f32 %v526, %v536
      %v563 = vmul.f32 %v527, %v536
      %v564 = vmul.f32 %v528, %v536
      %v565 = vmul.f32 %v529, %v536
      %v566 = vmul.f32 %v530, %v536
      %v567 = vmul.f32 %v531, %v536
      %v568 = vmul.f32 %v532, %v536
      %v569 = vadd.f32 %v468, %v537
      %v570 = vadd.f32 %v469, %v538
      %v571 = vadd.f32 %v470, %v539
      %v572 = vadd.f32 %v471, %v540
      %v573 = vadd.f32 %v472, %v541
      %v574 = vadd.f32 %v473, %v542
      %v575 = vadd.f32 %v474, %v543
      %v576 = vadd.f32 %v475, %v544
      %v577 = vadd.f32 %v476, %v545
      %v578 = vadd.f32 %v477, %v546
      %v579 = vadd.f32 %v478, %v547
      %v580 = vadd.f32 %v479, %v548
      %v581 = vadd.f32 %v480, %v549
      %v582 = vadd.f32 %v481, %v550
      %v583 = vadd.f32 %v482, %v551
      %v584 = vadd.f32 %v483, %v552
      %v585 = vadd.f32 %v484, %v553
      %v586 = vadd.f32 %v485, %v554
      %v587 = vadd.f32 %v486, %v555
      %v588 = vadd.f32 %v487, %v556
      %v589 = vadd.f32 %v488, %v557
      %v590 = vadd.f32 %v489, %v558
      %v591 = vadd.f32 %v490, %v559
      %v592 = vadd.f32 %v491, %v560
      %v593 = vadd.f32 %v492, %v561
      %v594 = vadd.f32 %v493, %v562
      %v595 = vadd.f32 %v494, %v563
      %v596 = vadd.f32 %v495, %v564
      %v597 = vadd.f32 %v496, %v565
      %v598 = vadd.f32 %v497, %v566
      %v599 = vadd.f32 %v498, %v567
      %v600 = vadd.f32 %v499, %v568
      %v601 = vld [vmem:[%s500 + $0x1] sm:$0xff]
      %v602 = vld [vmem:[%s500 + $0x9] sm:$0xff]
      %v603 = vld [vmem:[%s500 + $0x19] sm:$0xff]
      %v604 = vld [vmem:[%s500 + $0x21] sm:$0xff]
      %v605 = vld [vmem:[%s500 + $0x31] sm:$0xff]
      %v606 = vld [vmem:[%s500 + $0x39] sm:$0xff]
      %v607 = vld [vmem:[%s500 + $0x49] sm:$0xff]
      %v608 = vld [vmem:[%s500 + $0x51] sm:$0xff]
      %v609 = vld [vmem:[%s500 + $0x61] sm:$0xff]
      %v610 = vld [vmem:[%s500 + $0x69] sm:$0xff]
      %v611 = vld [vmem:[%s500 + $0x79] sm:$0xff]
      %v612 = vld [vmem:[%s500 + $0x81] sm:$0xff]
      %v613 = vld [vmem:[%s500 + $0x91] sm:$0xff]
      %v614 = vld [vmem:[%s500 + $0x99] sm:$0xff]
      %v615 = vld [vmem:[%s500 + $0xa9] sm:$0xff]
      %v616 = vld [vmem:[%s500 + $0xb1] sm:$0xff]
      %v617 = vld [vmem:[%s500 + $0xc1] sm:$0xff]
      %v618 = vld [vmem:[%s500 + $0xc9] sm:$0xff]
      %v619 = vld [vmem:[%s500 + $0xd9] sm:$0xff]
      %v620 = vld [vmem:[%s500 + $0xe1] sm:$0xff]
      %v621 = vld [vmem:[%s500 + $0xf1] sm:$0xff]
      %v622 = vld [vmem:[%s500 + $0xf9] sm:$0xff]
      %v623 = vld [vmem:[%s500 + $0x109] sm:$0xff]
      %v624 = vld [vmem:[%s500 + $0x111] sm:$0xff]
      %v625 = vld [vmem:[%s500 + $0x121] sm:$0xff]
      %v626 = vld [vmem:[%s500 + $0x129] sm:$0xff]
      %v627 = vld [vmem:[%s500 + $0x139] sm:$0xff]
      %v628 = vld [vmem:[%s500 + $0x141] sm:$0xff]
      %v629 = vld [vmem:[%s500 + $0x151] sm:$0xff]
      %v630 = vld [vmem:[%s500 + $0x159] sm:$0xff]
      %v631 = vld [vmem:[%s500 + $0x169] sm:$0xff]
      %v632 = vld [vmem:[%s500 + $0x171] sm:$0xff]
      %v633 = vlaneseq
      %v634 = vshrl.u32 %v633, 7
      %v635 = vsub.s32 1, %v634
      %v636 = vrot.slane %v227, %v635
      %v637 = vmul.f32 %v601, %v636
      %v638 = vmul.f32 %v602, %v636
      %v639 = vmul.f32 %v603, %v636
      %v640 = vmul.f32 %v604, %v636
      %v641 = vmul.f32 %v605, %v636
      %v642 = vmul.f32 %v606, %v636
      %v643 = vmul.f32 %v607, %v636
      %v644 = vmul.f32 %v608, %v636
      %v645 = vmul.f32 %v609, %v636
      %v646 = vmul.f32 %v610, %v636
      %v647 = vmul.f32 %v611, %v636
      %v648 = vmul.f32 %v612, %v636
      %v649 = vmul.f32 %v613, %v636
      %v650 = vmul.f32 %v614, %v636
      %v651 = vmul.f32 %v615, %v636
      %v652 = vmul.f32 %v616, %v636
      %v653 = vmul.f32 %v617, %v636
      %v654 = vmul.f32 %v618, %v636
      %v655 = vmul.f32 %v619, %v636
      %v656 = vmul.f32 %v620, %v636
      %v657 = vmul.f32 %v621, %v636
      %v658 = vmul.f32 %v622, %v636
      %v659 = vmul.f32 %v623, %v636
      %v660 = vmul.f32 %v624, %v636
      %v661 = vmul.f32 %v625, %v636
      %v662 = vmul.f32 %v626, %v636
      %v663 = vmul.f32 %v627, %v636
      %v664 = vmul.f32 %v628, %v636
      %v665 = vmul.f32 %v629, %v636
      %v666 = vmul.f32 %v630, %v636
      %v667 = vmul.f32 %v631, %v636
      %v668 = vmul.f32 %v632, %v636
      %v669 = vadd.f32 %v569, %v637
      %v670 = vadd.f32 %v570, %v638
      %v671 = vadd.f32 %v571, %v639
      %v672 = vadd.f32 %v572, %v640
      %v673 = vadd.f32 %v573, %v641
      %v674 = vadd.f32 %v574, %v642
      %v675 = vadd.f32 %v575, %v643
      %v676 = vadd.f32 %v576, %v644
      %v677 = vadd.f32 %v577, %v645
      %v678 = vadd.f32 %v578, %v646
      %v679 = vadd.f32 %v579, %v647
      %v680 = vadd.f32 %v580, %v648
      %v681 = vadd.f32 %v581, %v649
      %v682 = vadd.f32 %v582, %v650
      %v683 = vadd.f32 %v583, %v651
      %v684 = vadd.f32 %v584, %v652
      %v685 = vadd.f32 %v585, %v653
      %v686 = vadd.f32 %v586, %v654
      %v687 = vadd.f32 %v587, %v655
      %v688 = vadd.f32 %v588, %v656
      %v689 = vadd.f32 %v589, %v657
      %v690 = vadd.f32 %v590, %v658
      %v691 = vadd.f32 %v591, %v659
      %v692 = vadd.f32 %v592, %v660
      %v693 = vadd.f32 %v593, %v661
      %v694 = vadd.f32 %v594, %v662
      %v695 = vadd.f32 %v595, %v663
      %v696 = vadd.f32 %v596, %v664
      %v697 = vadd.f32 %v597, %v665
      %v698 = vadd.f32 %v598, %v666
      %v699 = vadd.f32 %v599, %v667
      %v700 = vadd.f32 %v600, %v668
      %v701 = vld [vmem:[%s500 + $0x2] sm:$0xff]
      %v702 = vld [vmem:[%s500 + $0xa] sm:$0xff]
      %v703 = vld [vmem:[%s500 + $0x1a] sm:$0xff]
      %v704 = vld [vmem:[%s500 + $0x22] sm:$0xff]
      %v705 = vld [vmem:[%s500 + $0x32] sm:$0xff]
      %v706 = vld [vmem:[%s500 + $0x3a] sm:$0xff]
      %v707 = vld [vmem:[%s500 + $0x4a] sm:$0xff]
      %v708 = vld [vmem:[%s500 + $0x52] sm:$0xff]
      %v709 = vld [vmem:[%s500 + $0x62] sm:$0xff]
      %v710 = vld [vmem:[%s500 + $0x6a] sm:$0xff]
      %v711 = vld [vmem:[%s500 + $0x7a] sm:$0xff]
      %v712 = vld [vmem:[%s500 + $0x82] sm:$0xff]
      %v713 = vld [vmem:[%s500 + $0x92] sm:$0xff]
      %v714 = vld [vmem:[%s500 + $0x9a] sm:$0xff]
      %v715 = vld [vmem:[%s500 + $0xaa] sm:$0xff]
      %v716 = vld [vmem:[%s500 + $0xb2] sm:$0xff]
      %v717 = vld [vmem:[%s500 + $0xc2] sm:$0xff]
      %v718 = vld [vmem:[%s500 + $0xca] sm:$0xff]
      %v719 = vld [vmem:[%s500 + $0xda] sm:$0xff]
      %v720 = vld [vmem:[%s500 + $0xe2] sm:$0xff]
      %v721 = vld [vmem:[%s500 + $0xf2] sm:$0xff]
      %v722 = vld [vmem:[%s500 + $0xfa] sm:$0xff]
      %v723 = vld [vmem:[%s500 + $0x10a] sm:$0xff]
      %v724 = vld [vmem:[%s500 + $0x112] sm:$0xff]
      %v725 = vld [vmem:[%s500 + $0x122] sm:$0xff]
      %v726 = vld [vmem:[%s500 + $0x12a] sm:$0xff]
      %v727 = vld [vmem:[%s500 + $0x13a] sm:$0xff]
      %v728 = vld [vmem:[%s500 + $0x142] sm:$0xff]
      %v729 = vld [vmem:[%s500 + $0x152] sm:$0xff]
      %v730 = vld [vmem:[%s500 + $0x15a] sm:$0xff]
      %v731 = vld [vmem:[%s500 + $0x16a] sm:$0xff]
      %v732 = vld [vmem:[%s500 + $0x172] sm:$0xff]
      %v733 = vlaneseq
      %v734 = vshrl.u32 %v733, 7
      %v735 = vsub.s32 2, %v734
      %v736 = vrot.slane %v227, %v735
      %v737 = vmul.f32 %v701, %v736
      %v738 = vmul.f32 %v702, %v736
      %v739 = vmul.f32 %v703, %v736
      %v740 = vmul.f32 %v704, %v736
      %v741 = vmul.f32 %v705, %v736
      %v742 = vmul.f32 %v706, %v736
      %v743 = vmul.f32 %v707, %v736
      %v744 = vmul.f32 %v708, %v736
      %v745 = vmul.f32 %v709, %v736
      %v746 = vmul.f32 %v710, %v736
      %v747 = vmul.f32 %v711, %v736
      %v748 = vmul.f32 %v712, %v736
      %v749 = vmul.f32 %v713, %v736
      %v750 = vmul.f32 %v714, %v736
      %v751 = vmul.f32 %v715, %v736
      %v752 = vmul.f32 %v716, %v736
      %v753 = vmul.f32 %v717, %v736
      %v754 = vmul.f32 %v718, %v736
      %v755 = vmul.f32 %v719, %v736
      %v756 = vmul.f32 %v720, %v736
      %v757 = vmul.f32 %v721, %v736
      %v758 = vmul.f32 %v722, %v736
      %v759 = vmul.f32 %v723, %v736
      %v760 = vmul.f32 %v724, %v736
      %v761 = vmul.f32 %v725, %v736
      %v762 = vmul.f32 %v726, %v736
      %v763 = vmul.f32 %v727, %v736
      %v764 = vmul.f32 %v728, %v736
      %v765 = vmul.f32 %v729, %v736
      %v766 = vmul.f32 %v730, %v736
      %v767 = vmul.f32 %v731, %v736
      %v768 = vmul.f32 %v732, %v736
      %v769 = vadd.f32 %v669, %v737
      %v770 = vadd.f32 %v670, %v738
      %v771 = vadd.f32 %v671, %v739
      %v772 = vadd.f32 %v672, %v740
      %v773 = vadd.f32 %v673, %v741
      %v774 = vadd.f32 %v674, %v742
      %v775 = vadd.f32 %v675, %v743
      %v776 = vadd.f32 %v676, %v744
      %v777 = vadd.f32 %v677, %v745
      %v778 = vadd.f32 %v678, %v746
      %v779 = vadd.f32 %v679, %v747
      %v780 = vadd.f32 %v680, %v748
      %v781 = vadd.f32 %v681, %v749
      %v782 = vadd.f32 %v682, %v750
      %v783 = vadd.f32 %v683, %v751
      %v784 = vadd.f32 %v684, %v752
      %v785 = vadd.f32 %v685, %v753
      %v786 = vadd.f32 %v686, %v754
      %v787 = vadd.f32 %v687, %v755
      %v788 = vadd.f32 %v688, %v756
      %v789 = vadd.f32 %v689, %v757
      %v790 = vadd.f32 %v690, %v758
      %v791 = vadd.f32 %v691, %v759
      %v792 = vadd.f32 %v692, %v760
      %v793 = vadd.f32 %v693, %v761
      %v794 = vadd.f32 %v694, %v762
      %v795 = vadd.f32 %v695, %v763
      %v796 = vadd.f32 %v696, %v764
      %v797 = vadd.f32 %v697, %v765
      %v798 = vadd.f32 %v698, %v766
      %v799 = vadd.f32 %v699, %v767
      %v800 = vadd.f32 %v700, %v768
      %s801 = scalar_lea.vmem %s219, 48
      %v802 = vld [vmem:[%s801] sm:$0xff]
      %v803 = vld [vmem:[%s801 + $0x8] sm:$0xff]
      %v804 = vld [vmem:[%s801 + $0x18] sm:$0xff]
      %v805 = vld [vmem:[%s801 + $0x20] sm:$0xff]
      %v806 = vld [vmem:[%s801 + $0x30] sm:$0xff]
      %v807 = vld [vmem:[%s801 + $0x38] sm:$0xff]
      %v808 = vld [vmem:[%s801 + $0x48] sm:$0xff]
      %v809 = vld [vmem:[%s801 + $0x50] sm:$0xff]
      %v810 = vld [vmem:[%s801 + $0x60] sm:$0xff]
      %v811 = vld [vmem:[%s801 + $0x68] sm:$0xff]
      %v812 = vld [vmem:[%s801 + $0x78] sm:$0xff]
      %v813 = vld [vmem:[%s801 + $0x80] sm:$0xff]
      %v814 = vld [vmem:[%s801 + $0x90] sm:$0xff]
      %v815 = vld [vmem:[%s801 + $0x98] sm:$0xff]
      %v816 = vld [vmem:[%s801 + $0xa8] sm:$0xff]
      %v817 = vld [vmem:[%s801 + $0xb0] sm:$0xff]
      %v818 = vld [vmem:[%s801 + $0xc0] sm:$0xff]
      %v819 = vld [vmem:[%s801 + $0xc8] sm:$0xff]
      %v820 = vld [vmem:[%s801 + $0xd8] sm:$0xff]
      %v821 = vld [vmem:[%s801 + $0xe0] sm:$0xff]
      %v822 = vld [vmem:[%s801 + $0xf0] sm:$0xff]
      %v823 = vld [vmem:[%s801 + $0xf8] sm:$0xff]
      %v824 = vld [vmem:[%s801 + $0x108] sm:$0xff]
      %v825 = vld [vmem:[%s801 + $0x110] sm:$0xff]
      %v826 = vld [vmem:[%s801 + $0x120] sm:$0xff]
      %v827 = vld [vmem:[%s801 + $0x128] sm:$0xff]
      %v828 = vld [vmem:[%s801 + $0x138] sm:$0xff]
      %v829 = vld [vmem:[%s801 + $0x140] sm:$0xff]
      %v830 = vld [vmem:[%s801 + $0x150] sm:$0xff]
      %v831 = vld [vmem:[%s801 + $0x158] sm:$0xff]
      %v832 = vld [vmem:[%s801 + $0x168] sm:$0xff]
      %v833 = vld [vmem:[%s801 + $0x170] sm:$0xff]
      %v834 = vlaneseq
      %v835 = vshrl.u32 %v834, 7
      %v836 = vsub.s32 0, %v835
      %v837 = vrot.slane %v228, %v836
      %v838 = vmul.f32 %v802, %v837
      %v839 = vmul.f32 %v803, %v837
      %v840 = vmul.f32 %v804, %v837
      %v841 = vmul.f32 %v805, %v837
      %v842 = vmul.f32 %v806, %v837
      %v843 = vmul.f32 %v807, %v837
      %v844 = vmul.f32 %v808, %v837
      %v845 = vmul.f32 %v809, %v837
      %v846 = vmul.f32 %v810, %v837
      %v847 = vmul.f32 %v811, %v837
      %v848 = vmul.f32 %v812, %v837
      %v849 = vmul.f32 %v813, %v837
      %v850 = vmul.f32 %v814, %v837
      %v851 = vmul.f32 %v815, %v837
      %v852 = vmul.f32 %v816, %v837
      %v853 = vmul.f32 %v817, %v837
      %v854 = vmul.f32 %v818, %v837
      %v855 = vmul.f32 %v819, %v837
      %v856 = vmul.f32 %v820, %v837
      %v857 = vmul.f32 %v821, %v837
      %v858 = vmul.f32 %v822, %v837
      %v859 = vmul.f32 %v823, %v837
      %v860 = vmul.f32 %v824, %v837
      %v861 = vmul.f32 %v825, %v837
      %v862 = vmul.f32 %v826, %v837
      %v863 = vmul.f32 %v827, %v837
      %v864 = vmul.f32 %v828, %v837
      %v865 = vmul.f32 %v829, %v837
      %v866 = vmul.f32 %v830, %v837
      %v867 = vmul.f32 %v831, %v837
      %v868 = vmul.f32 %v832, %v837
      %v869 = vmul.f32 %v833, %v837
      %v870 = vadd.f32 %v769, %v838
      %v871 = vadd.f32 %v770, %v839
      %v872 = vadd.f32 %v771, %v840
      %v873 = vadd.f32 %v772, %v841
      %v874 = vadd.f32 %v773, %v842
      %v875 = vadd.f32 %v774, %v843
      %v876 = vadd.f32 %v775, %v844
      %v877 = vadd.f32 %v776, %v845
      %v878 = vadd.f32 %v777, %v846
      %v879 = vadd.f32 %v778, %v847
      %v880 = vadd.f32 %v779, %v848
      %v881 = vadd.f32 %v780, %v849
      %v882 = vadd.f32 %v781, %v850
      %v883 = vadd.f32 %v782, %v851
      %v884 = vadd.f32 %v783, %v852
      %v885 = vadd.f32 %v784, %v853
      %v886 = vadd.f32 %v785, %v854
      %v887 = vadd.f32 %v786, %v855
      %v888 = vadd.f32 %v787, %v856
      %v889 = vadd.f32 %v788, %v857
      %v890 = vadd.f32 %v789, %v858
      %v891 = vadd.f32 %v790, %v859
      %v892 = vadd.f32 %v791, %v860
      %v893 = vadd.f32 %v792, %v861
      %v894 = vadd.f32 %v793, %v862
      %v895 = vadd.f32 %v794, %v863
      %v896 = vadd.f32 %v795, %v864
      %v897 = vadd.f32 %v796, %v865
      %v898 = vadd.f32 %v797, %v866
      %v899 = vadd.f32 %v798, %v867
      %v900 = vadd.f32 %v799, %v868
      %v901 = vadd.f32 %v800, %v869
      %v902 = vld [vmem:[%s801 + $0x1] sm:$0xff]
      %v903 = vld [vmem:[%s801 + $0x9] sm:$0xff]
      %v904 = vld [vmem:[%s801 + $0x19] sm:$0xff]
      %v905 = vld [vmem:[%s801 + $0x21] sm:$0xff]
      %v906 = vld [vmem:[%s801 + $0x31] sm:$0xff]
      %v907 = vld [vmem:[%s801 + $0x39] sm:$0xff]
      %v908 = vld [vmem:[%s801 + $0x49] sm:$0xff]
      %v909 = vld [vmem:[%s801 + $0x51] sm:$0xff]
      %v910 = vld [vmem:[%s801 + $0x61] sm:$0xff]
      %v911 = vld [vmem:[%s801 + $0x69] sm:$0xff]
      %v912 = vld [vmem:[%s801 + $0x79] sm:$0xff]
      %v913 = vld [vmem:[%s801 + $0x81] sm:$0xff]
      %v914 = vld [vmem:[%s801 + $0x91] sm:$0xff]
      %v915 = vld [vmem:[%s801 + $0x99] sm:$0xff]
      %v916 = vld [vmem:[%s801 + $0xa9] sm:$0xff]
      %v917 = vld [vmem:[%s801 + $0xb1] sm:$0xff]
      %v918 = vld [vmem:[%s801 + $0xc1] sm:$0xff]
      %v919 = vld [vmem:[%s801 + $0xc9] sm:$0xff]
      %v920 = vld [vmem:[%s801 + $0xd9] sm:$0xff]
      %v921 = vld [vmem:[%s801 + $0xe1] sm:$0xff]
      %v922 = vld [vmem:[%s801 + $0xf1] sm:$0xff]
      %v923 = vld [vmem:[%s801 + $0xf9] sm:$0xff]
      %v924 = vld [vmem:[%s801 + $0x109] sm:$0xff]
      %v925 = vld [vmem:[%s801 + $0x111] sm:$0xff]
      %v926 = vld [vmem:[%s801 + $0x121] sm:$0xff]
      %v927 = vld [vmem:[%s801 + $0x129] sm:$0xff]
      %v928 = vld [vmem:[%s801 + $0x139] sm:$0xff]
      %v929 = vld [vmem:[%s801 + $0x141] sm:$0xff]
      %v930 = vld [vmem:[%s801 + $0x151] sm:$0xff]
      %v931 = vld [vmem:[%s801 + $0x159] sm:$0xff]
      %v932 = vld [vmem:[%s801 + $0x169] sm:$0xff]
      %v933 = vld [vmem:[%s801 + $0x171] sm:$0xff]
      %v934 = vlaneseq
      %v935 = vshrl.u32 %v934, 7
      %v936 = vsub.s32 1, %v935
      %v937 = vrot.slane %v228, %v936
      %v938 = vmul.f32 %v902, %v937
      %v939 = vmul.f32 %v903, %v937
      %v940 = vmul.f32 %v904, %v937
      %v941 = vmul.f32 %v905, %v937
      %v942 = vmul.f32 %v906, %v937
      %v943 = vmul.f32 %v907, %v937
      %v944 = vmul.f32 %v908, %v937
      %v945 = vmul.f32 %v909, %v937
      %v946 = vmul.f32 %v910, %v937
      %v947 = vmul.f32 %v911, %v937
      %v948 = vmul.f32 %v912, %v937
      %v949 = vmul.f32 %v913, %v937
      %v950 = vmul.f32 %v914, %v937
      %v951 = vmul.f32 %v915, %v937
      %v952 = vmul.f32 %v916, %v937
      %v953 = vmul.f32 %v917, %v937
      %v954 = vmul.f32 %v918, %v937
      %v955 = vmul.f32 %v919, %v937
      %v956 = vmul.f32 %v920, %v937
      %v957 = vmul.f32 %v921, %v937
      %v958 = vmul.f32 %v922, %v937
      %v959 = vmul.f32 %v923, %v937
      %v960 = vmul.f32 %v924, %v937
      %v961 = vmul.f32 %v925, %v937
      %v962 = vmul.f32 %v926, %v937
      %v963 = vmul.f32 %v927, %v937
      %v964 = vmul.f32 %v928, %v937
      %v965 = vmul.f32 %v929, %v937
      %v966 = vmul.f32 %v930, %v937
      %v967 = vmul.f32 %v931, %v937
      %v968 = vmul.f32 %v932, %v937
      %v969 = vmul.f32 %v933, %v937
      %v970 = vadd.f32 %v870, %v938
      %v971 = vadd.f32 %v871, %v939
      %v972 = vadd.f32 %v872, %v940
      %v973 = vadd.f32 %v873, %v941
      %v974 = vadd.f32 %v874, %v942
      %v975 = vadd.f32 %v875, %v943
      %v976 = vadd.f32 %v876, %v944
      %v977 = vadd.f32 %v877, %v945
      %v978 = vadd.f32 %v878, %v946
      %v979 = vadd.f32 %v879, %v947
      %v980 = vadd.f32 %v880, %v948
      %v981 = vadd.f32 %v881, %v949
      %v982 = vadd.f32 %v882, %v950
      %v983 = vadd.f32 %v883, %v951
      %v984 = vadd.f32 %v884, %v952
      %v985 = vadd.f32 %v885, %v953
      %v986 = vadd.f32 %v886, %v954
      %v987 = vadd.f32 %v887, %v955
      %v988 = vadd.f32 %v888, %v956
      %v989 = vadd.f32 %v889, %v957
      %v990 = vadd.f32 %v890, %v958
      %v991 = vadd.f32 %v891, %v959
      %v992 = vadd.f32 %v892, %v960
      %v993 = vadd.f32 %v893, %v961
      %v994 = vadd.f32 %v894, %v962
      %v995 = vadd.f32 %v895, %v963
      %v996 = vadd.f32 %v896, %v964
      %v997 = vadd.f32 %v897, %v965
      %v998 = vadd.f32 %v898, %v966
      %v999 = vadd.f32 %v899, %v967
      %v1000 = vadd.f32 %v900, %v968
      %v1001 = vadd.f32 %v901, %v969
      %v1002 = vld [vmem:[%s801 + $0x2] sm:$0xff]
      %v1003 = vld [vmem:[%s801 + $0xa] sm:$0xff]
      %v1004 = vld [vmem:[%s801 + $0x1a] sm:$0xff]
      %v1005 = vld [vmem:[%s801 + $0x22] sm:$0xff]
      %v1006 = vld [vmem:[%s801 + $0x32] sm:$0xff]
      %v1007 = vld [vmem:[%s801 + $0x3a] sm:$0xff]
      %v1008 = vld [vmem:[%s801 + $0x4a] sm:$0xff]
      %v1009 = vld [vmem:[%s801 + $0x52] sm:$0xff]
      %v1010 = vld [vmem:[%s801 + $0x62] sm:$0xff]
      %v1011 = vld [vmem:[%s801 + $0x6a] sm:$0xff]
      %v1012 = vld [vmem:[%s801 + $0x7a] sm:$0xff]
      %v1013 = vld [vmem:[%s801 + $0x82] sm:$0xff]
      %v1014 = vld [vmem:[%s801 + $0x92] sm:$0xff]
      %v1015 = vld [vmem:[%s801 + $0x9a] sm:$0xff]
      %v1016 = vld [vmem:[%s801 + $0xaa] sm:$0xff]
      %v1017 = vld [vmem:[%s801 + $0xb2] sm:$0xff]
      %v1018 = vld [vmem:[%s801 + $0xc2] sm:$0xff]
      %v1019 = vld [vmem:[%s801 + $0xca] sm:$0xff]
      %v1020 = vld [vmem:[%s801 + $0xda] sm:$0xff]
      %v1021 = vld [vmem:[%s801 + $0xe2] sm:$0xff]
      %v1022 = vld [vmem:[%s801 + $0xf2] sm:$0xff]
      %v1023 = vld [vmem:[%s801 + $0xfa] sm:$0xff]
      %v1024 = vld [vmem:[%s801 + $0x10a] sm:$0xff]
      %v1025 = vld [vmem:[%s801 + $0x112] sm:$0xff]
      %v1026 = vld [vmem:[%s801 + $0x122] sm:$0xff]
      %v1027 = vld [vmem:[%s801 + $0x12a] sm:$0xff]
      %v1028 = vld [vmem:[%s801 + $0x13a] sm:$0xff]
      %v1029 = vld [vmem:[%s801 + $0x142] sm:$0xff]
      %v1030 = vld [vmem:[%s801 + $0x152] sm:$0xff]
      %v1031 = vld [vmem:[%s801 + $0x15a] sm:$0xff]
      %v1032 = vld [vmem:[%s801 + $0x16a] sm:$0xff]
      %v1033 = vld [vmem:[%s801 + $0x172] sm:$0xff]
      %v1034 = vlaneseq
      %v1035 = vshrl.u32 %v1034, 7
      %v1036 = vsub.s32 2, %v1035
      %v1037 = vrot.slane %v228, %v1036
      %v1038 = vmul.f32 %v1002, %v1037
      %v1039 = vmul.f32 %v1003, %v1037
      %v1040 = vmul.f32 %v1004, %v1037
      %v1041 = vmul.f32 %v1005, %v1037
      %v1042 = vmul.f32 %v1006, %v1037
      %v1043 = vmul.f32 %v1007, %v1037
      %v1044 = vmul.f32 %v1008, %v1037
      %v1045 = vmul.f32 %v1009, %v1037
      %v1046 = vmul.f32 %v1010, %v1037
      %v1047 = vmul.f32 %v1011, %v1037
      %v1048 = vmul.f32 %v1012, %v1037
      %v1049 = vmul.f32 %v1013, %v1037
      %v1050 = vmul.f32 %v1014, %v1037
      %v1051 = vmul.f32 %v1015, %v1037
      %v1052 = vmul.f32 %v1016, %v1037
      %v1053 = vmul.f32 %v1017, %v1037
      %v1054 = vmul.f32 %v1018, %v1037
      %v1055 = vmul.f32 %v1019, %v1037
      %v1056 = vmul.f32 %v1020, %v1037
      %v1057 = vmul.f32 %v1021, %v1037
      %v1058 = vmul.f32 %v1022, %v1037
      %v1059 = vmul.f32 %v1023, %v1037
      %v1060 = vmul.f32 %v1024, %v1037
      %v1061 = vmul.f32 %v1025, %v1037
      %v1062 = vmul.f32 %v1026, %v1037
      %v1063 = vmul.f32 %v1027, %v1037
      %v1064 = vmul.f32 %v1028, %v1037
      %v1065 = vmul.f32 %v1029, %v1037
      %v1066 = vmul.f32 %v1030, %v1037
      %v1067 = vmul.f32 %v1031, %v1037
      %v1068 = vmul.f32 %v1032, %v1037
      %v1069 = vmul.f32 %v1033, %v1037
      %v1070 = vadd.f32 %v970, %v1038
      %v1071 = vadd.f32 %v971, %v1039
      %v1072 = vadd.f32 %v972, %v1040
      %v1073 = vadd.f32 %v973, %v1041
      %v1074 = vadd.f32 %v974, %v1042
      %v1075 = vadd.f32 %v975, %v1043
      %v1076 = vadd.f32 %v976, %v1044
      %v1077 = vadd.f32 %v977, %v1045
      %v1078 = vadd.f32 %v978, %v1046
      %v1079 = vadd.f32 %v979, %v1047
      %v1080 = vadd.f32 %v980, %v1048
      %v1081 = vadd.f32 %v981, %v1049
      %v1082 = vadd.f32 %v982, %v1050
      %v1083 = vadd.f32 %v983, %v1051
      %v1084 = vadd.f32 %v984, %v1052
      %v1085 = vadd.f32 %v985, %v1053
      %v1086 = vadd.f32 %v986, %v1054
      %v1087 = vadd.f32 %v987, %v1055
      %v1088 = vadd.f32 %v988, %v1056
      %v1089 = vadd.f32 %v989, %v1057
      %v1090 = vadd.f32 %v990, %v1058
      %v1091 = vadd.f32 %v991, %v1059
      %v1092 = vadd.f32 %v992, %v1060
      %v1093 = vadd.f32 %v993, %v1061
      %v1094 = vadd.f32 %v994, %v1062
      %v1095 = vadd.f32 %v995, %v1063
      %v1096 = vadd.f32 %v996, %v1064
      %v1097 = vadd.f32 %v997, %v1065
      %v1098 = vadd.f32 %v998, %v1066
      %v1099 = vadd.f32 %v999, %v1067
      %v1100 = vadd.f32 %v1000, %v1068
      %v1101 = vadd.f32 %v1001, %v1069
      %v1103 = vlaneseq
      %v1104 = vshrl.u32 %v1103, 7
      %v1105 = vsub.s32 0, %v1104
      %v1106 = vrot.slane %v229, %v1105
      %v1108 = vadd.f32 %v1070, %v1106
      %v1109 = vadd.f32 %v1071, %v1106
      %v1110 = vadd.f32 %v1072, %v1106
      %v1111 = vadd.f32 %v1073, %v1106
      %v1112 = vadd.f32 %v1074, %v1106
      %v1113 = vadd.f32 %v1075, %v1106
      %v1114 = vadd.f32 %v1076, %v1106
      %v1115 = vadd.f32 %v1077, %v1106
      %v1116 = vadd.f32 %v1078, %v1106
      %v1117 = vadd.f32 %v1079, %v1106
      %v1118 = vadd.f32 %v1080, %v1106
      %v1119 = vadd.f32 %v1081, %v1106
      %v1120 = vadd.f32 %v1082, %v1106
      %v1121 = vadd.f32 %v1083, %v1106
      %v1122 = vadd.f32 %v1084, %v1106
      %v1123 = vadd.f32 %v1085, %v1106
      %v1124 = vadd.f32 %v1086, %v1106
      %v1125 = vadd.f32 %v1087, %v1106
      %v1126 = vadd.f32 %v1088, %v1106
      %v1127 = vadd.f32 %v1089, %v1106
      %v1128 = vadd.f32 %v1090, %v1106
      %v1129 = vadd.f32 %v1091, %v1106
      %v1130 = vadd.f32 %v1092, %v1106
      %v1131 = vadd.f32 %v1093, %v1106
      %v1132 = vadd.f32 %v1094, %v1106
      %v1133 = vadd.f32 %v1095, %v1106
      %v1134 = vadd.f32 %v1096, %v1106
      %v1135 = vadd.f32 %v1097, %v1106
      %v1136 = vadd.f32 %v1098, %v1106
      %v1137 = vadd.f32 %v1099, %v1106
      %v1138 = vadd.f32 %v1100, %v1106
      %v1139 = vadd.f32 %v1101, %v1106
      %v1140 = vmax.f32 %v1108, 0.0
      %v1141 = vmax.f32 %v1109, 0.0
      %v1142 = vmax.f32 %v1110, 0.0
      %v1143 = vmax.f32 %v1111, 0.0
      %v1144 = vmax.f32 %v1112, 0.0
      %v1145 = vmax.f32 %v1113, 0.0
      %v1146 = vmax.f32 %v1114, 0.0
      %v1147 = vmax.f32 %v1115, 0.0
      %v1148 = vmax.f32 %v1116, 0.0
      %v1149 = vmax.f32 %v1117, 0.0
      %v1150 = vmax.f32 %v1118, 0.0
      %v1151 = vmax.f32 %v1119, 0.0
      %v1152 = vmax.f32 %v1120, 0.0
      %v1153 = vmax.f32 %v1121, 0.0
      %v1154 = vmax.f32 %v1122, 0.0
      %v1155 = vmax.f32 %v1123, 0.0
      %v1156 = vmax.f32 %v1124, 0.0
      %v1157 = vmax.f32 %v1125, 0.0
      %v1158 = vmax.f32 %v1126, 0.0
      %v1159 = vmax.f32 %v1127, 0.0
      %v1160 = vmax.f32 %v1128, 0.0
      %v1161 = vmax.f32 %v1129, 0.0
      %v1162 = vmax.f32 %v1130, 0.0
      %v1163 = vmax.f32 %v1131, 0.0
      %v1164 = vmax.f32 %v1132, 0.0
      %v1165 = vmax.f32 %v1133, 0.0
      %v1166 = vmax.f32 %v1134, 0.0
      %v1167 = vmax.f32 %v1135, 0.0
      %v1168 = vmax.f32 %v1136, 0.0
      %v1169 = vmax.f32 %v1137, 0.0
      %v1170 = vmax.f32 %v1138, 0.0
      %v1171 = vmax.f32 %v1139, 0.0
      %v1172 = vpack.c.bf16 %v1141, %v1140
      %v1173 = vpack.c.bf16 %v1143, %v1142
      %v1174 = vpack.c.bf16 %v1145, %v1144
      %v1175 = vpack.c.bf16 %v1147, %v1146
      %v1176 = vpack.c.bf16 %v1149, %v1148
      %v1177 = vpack.c.bf16 %v1151, %v1150
      %v1178 = vpack.c.bf16 %v1153, %v1152
      %v1179 = vpack.c.bf16 %v1155, %v1154
      %v1180 = vpack.c.bf16 %v1157, %v1156
      %v1181 = vpack.c.bf16 %v1159, %v1158
      %v1182 = vpack.c.bf16 %v1161, %v1160
      %v1183 = vpack.c.bf16 %v1163, %v1162
      %v1184 = vpack.c.bf16 %v1165, %v1164
      %v1185 = vpack.c.bf16 %v1167, %v1166
      %v1186 = vpack.c.bf16 %v1169, %v1168
      %v1187 = vpack.c.bf16 %v1171, %v1170
      %v1189 = vlaneseq
      %v1190 = vshrl.u32 %v1189, 7
      %v1191 = vsub.s32 0, %v1190
      %v1192 = vrot.slane %v231, %v1191
      %vm1194 = vcmask 64512
      %v1196 = vsel %vm1194, %v1172, 0
      %v1199 = vsel %vm1194, %v1173, 0
      %v1202 = vsel %vm1194, %v1174, 0
      %v1205 = vsel %vm1194, %v1175, 0
      %v1208 = vsel %vm1194, %v1176, 0
      %v1211 = vsel %vm1194, %v1177, 0
      %v1214 = vsel %vm1194, %v1178, 0
      %v1217 = vsel %vm1194, %v1179, 0
      %v1220 = vsel %vm1194, %v1180, 0
      %v1223 = vsel %vm1194, %v1181, 0
      %v1226 = vsel %vm1194, %v1182, 0
      %v1229 = vsel %vm1194, %v1183, 0
      %v1232 = vsel %vm1194, %v1184, 0
      %v1235 = vsel %vm1194, %v1185, 0
      %v1238 = vsel %vm1194, %v1186, 0
      %v1241 = vsel %vm1194, %v1187, 0
      %vm1243 = vcmask 1043456
      %v1245 = vsel %vm1243, %v230, 0
      %1247 = vmatprep.subr.bf16.mxu0 0
      %1248 = vmatpush1.bf16.msra.mxu0 %v1245
      %1249 = vmatprep.subr.bf16.mxu0 0
      %1250 = vmatpush1.bf16.msra.mxu0 0
      %1251 = vmatprep.subr.bf16.mxu0 0
      %1252 = vmatpush1.bf16.msra.mxu0 0
      %1253 = vmatprep.subr.bf16.mxu0 0
      %1254 = vmatpush1.bf16.msra.mxu0 0
      %1255 = vmatprep.subr.bf16.mxu0 0
      %1256 = vmatpush1.bf16.msra.mxu0 0
      %1257 = vmatprep.subr.bf16.mxu0 0
      %1258 = vmatpush1.bf16.msra.mxu0 0
      %1259 = vmatprep.subr.bf16.mxu0 0
      %1260 = vmatpush1.bf16.msra.mxu0 0
      %1261 = vmatprep.subr.bf16.mxu0 0
      %1262 = vmatpush1.bf16.msra.mxu0 0
      %1263 = vmatprep.subr.bf16.mxu0 0
      %1264 = vmatpush1.bf16.msra.mxu0 0
      %1265 = vmatprep.subr.bf16.mxu0 0
      %1266 = vmatpush1.bf16.msra.mxu0 0
      %1267 = vmatprep.subr.bf16.mxu0 0
      %1268 = vmatpush1.bf16.msra.mxu0 0
      %1269 = vmatprep.subr.bf16.mxu0 0
      %1270 = vmatpush1.bf16.msra.mxu0 0
      %1271 = vmatprep.subr.bf16.mxu0 0
      %1272 = vmatpush1.bf16.msra.mxu0 0
      %1273 = vmatprep.subr.bf16.mxu0 0
      %1274 = vmatpush1.bf16.msra.mxu0 0
      %1275 = vmatprep.subr.bf16.mxu0 0
      %1276 = vmatpush1.bf16.msra.mxu0 0
      %1277 = vmatprep.subr.bf16.mxu0 0
      %1278 = vmatpush1.bf16.msra.mxu0 0
      %1279 = vmatprep.mubr.bf16.mxu0 0
      %1280 = vmatmul.mubr.bf16.gmra.mrb[0].mxu0 %v1196
      %v1281 = vpop.f32.mrb[0].mxu0
      %v1282 = vadd.f32 %v1192, %v1281
      %v1283 = vpop.f32.mrb[0].mxu0
      %v1284 = vpop.f32.mrb[0].mxu0
      %v1285 = vadd.f32 %v1192, %v1284
      %v1286 = vpop.f32.mrb[0].mxu0
      %1287 = vmatprep.mubr.bf16.mxu0 0
      %1288 = vmatmul.mubr.bf16.gmra.mrb[0].mxu0 %v1199
      %v1289 = vpop.f32.mrb[0].mxu0
      %v1290 = vadd.f32 %v1192, %v1289
      %v1291 = vpop.f32.mrb[0].mxu0
      %v1292 = vpop.f32.mrb[0].mxu0
      %v1293 = vadd.f32 %v1192, %v1292
      %v1294 = vpop.f32.mrb[0].mxu0
      %1295 = vmatprep.mubr.bf16.mxu0 0
      %1296 = vmatmul.mubr.bf16.gmra.mrb[0].mxu0 %v1202
      %v1297 = vpop.f32.mrb[0].mxu0
      %v1298 = vadd.f32 %v1192, %v1297
      %v1299 = vpop.f32.mrb[0].mxu0
      %v1300 = vpop.f32.mrb[0].mxu0
      %v1301 = vadd.f32 %v1192, %v1300
      %v1302 = vpop.f32.mrb[0].mxu0
      %1303 = vmatprep.mubr.bf16.mxu0 0
      %1304 = vmatmul.mubr.bf16.gmra.mrb[0].mxu0 %v1205
      %v1305 = vpop.f32.mrb[0].mxu0
      %v1306 = vadd.f32 %v1192, %v1305
      %v1307 = vpop.f32.mrb[0].mxu0
      %v1308 = vpop.f32.mrb[0].mxu0
      %v1309 = vadd.f32 %v1192, %v1308
      %v1310 = vpop.f32.mrb[0].mxu0
      %1311 = vmatprep.mubr.bf16.mxu0 0
      %1312 = vmatmul.mubr.bf16.gmra.mrb[0].mxu0 %v1208
      %v1313 = vpop.f32.mrb[0].mxu0
      %v1314 = vadd.f32 %v1192, %v1313
      %v1315 = vpop.f32.mrb[0].mxu0
      %v1316 = vpop.f32.mrb[0].mxu0
      %v1317 = vadd.f32 %v1192, %v1316
      %v1318 = vpop.f32.mrb[0].mxu0
      %1319 = vmatprep.mubr.bf16.mxu0 0
      %1320 = vmatmul.mubr.bf16.gmra.mrb[0].mxu0 %v1211
      %v1321 = vpop.f32.mrb[0].mxu0
      %v1322 = vadd.f32 %v1192, %v1321
      %v1323 = vpop.f32.mrb[0].mxu0
      %v1324 = vpop.f32.mrb[0].mxu0
      %v1325 = vadd.f32 %v1192, %v1324
      %v1326 = vpop.f32.mrb[0].mxu0
      %1327 = vmatprep.mubr.bf16.mxu0 0
      %1328 = vmatmul.mubr.bf16.gmra.mrb[0].mxu0 %v1214
      %v1329 = vpop.f32.mrb[0].mxu0
      %v1330 = vadd.f32 %v1192, %v1329
      %v1331 = vpop.f32.mrb[0].mxu0
      %v1332 = vpop.f32.mrb[0].mxu0
      %v1333 = vadd.f32 %v1192, %v1332
      %v1334 = vpop.f32.mrb[0].mxu0
      %1335 = vmatprep.mubr.bf16.mxu0 0
      %1336 = vmatmul.mubr.bf16.gmra.mrb[0].mxu0 %v1217
      %v1337 = vpop.f32.mrb[0].mxu0
      %v1338 = vadd.f32 %v1192, %v1337
      %v1339 = vpop.f32.mrb[0].mxu0
      %v1340 = vpop.f32.mrb[0].mxu0
      %v1341 = vadd.f32 %v1192, %v1340
      %v1342 = vpop.f32.mrb[0].mxu0
      %1343 = vmatprep.mubr.bf16.mxu0 0
      %1344 = vmatmul.mubr.bf16.gmra.mrb[0].mxu0 %v1220
      %v1345 = vpop.f32.mrb[0].mxu0
      %v1346 = vadd.f32 %v1192, %v1345
      %v1347 = vpop.f32.mrb[0].mxu0
      %v1348 = vpop.f32.mrb[0].mxu0
      %v1349 = vadd.f32 %v1192, %v1348
      %v1350 = vpop.f32.mrb[0].mxu0
      %1351 = vmatprep.mubr.bf16.mxu0 0
      %1352 = vmatmul.mubr.bf16.gmra.mrb[0].mxu0 %v1223
      %v1353 = vpop.f32.mrb[0].mxu0
      %v1354 = vadd.f32 %v1192, %v1353
      %v1355 = vpop.f32.mrb[0].mxu0
      %v1356 = vpop.f32.mrb[0].mxu0
      %v1357 = vadd.f32 %v1192, %v1356
      %v1358 = vpop.f32.mrb[0].mxu0
      %1359 = vmatprep.mubr.bf16.mxu0 0
      %1360 = vmatmul.mubr.bf16.gmra.mrb[0].mxu0 %v1226
      %v1361 = vpop.f32.mrb[0].mxu0
      %v1362 = vadd.f32 %v1192, %v1361
      %v1363 = vpop.f32.mrb[0].mxu0
      %v1364 = vpop.f32.mrb[0].mxu0
      %v1365 = vadd.f32 %v1192, %v1364
      %v1366 = vpop.f32.mrb[0].mxu0
      %1367 = vmatprep.mubr.bf16.mxu0 0
      %1368 = vmatmul.mubr.bf16.gmra.mrb[0].mxu0 %v1229
      %v1369 = vpop.f32.mrb[0].mxu0
      %v1370 = vadd.f32 %v1192, %v1369
      %v1371 = vpop.f32.mrb[0].mxu0
      %v1372 = vpop.f32.mrb[0].mxu0
      %v1373 = vadd.f32 %v1192, %v1372
      %v1374 = vpop.f32.mrb[0].mxu0
      %1375 = vmatprep.mubr.bf16.mxu0 0
      %1376 = vmatmul.mubr.bf16.gmra.mrb[0].mxu0 %v1232
      %v1377 = vpop.f32.mrb[0].mxu0
      %v1378 = vadd.f32 %v1192, %v1377
      %v1379 = vpop.f32.mrb[0].mxu0
      %v1380 = vpop.f32.mrb[0].mxu0
      %v1381 = vadd.f32 %v1192, %v1380
      %v1382 = vpop.f32.mrb[0].mxu0
      %1383 = vmatprep.mubr.bf16.mxu0 0
      %1384 = vmatmul.mubr.bf16.gmra.mrb[0].mxu0 %v1235
      %v1385 = vpop.f32.mrb[0].mxu0
      %v1386 = vadd.f32 %v1192, %v1385
      %v1387 = vpop.f32.mrb[0].mxu0
      %v1388 = vpop.f32.mrb[0].mxu0
      %v1389 = vadd.f32 %v1192, %v1388
      %v1390 = vpop.f32.mrb[0].mxu0
      %1391 = vmatprep.mubr.bf16.mxu0 0
      %1392 = vmatmul.mubr.bf16.gmra.mrb[0].mxu0 %v1238
      %v1393 = vpop.f32.mrb[0].mxu0
      %v1394 = vadd.f32 %v1192, %v1393
      %v1395 = vpop.f32.mrb[0].mxu0
      %v1396 = vpop.f32.mrb[0].mxu0
      %v1397 = vadd.f32 %v1192, %v1396
      %v1398 = vpop.f32.mrb[0].mxu0
      %1399 = vmatprep.mubr.bf16.mxu0 0
      %1400 = vmatmul.mubr.bf16.gmra.mrb[0].mxu0 %v1241
      %v1401 = vpop.f32.mrb[0].mxu0
      %v1402 = vadd.f32 %v1192, %v1401
      %v1403 = vpop.f32.mrb[0].mxu0
      %v1404 = vpop.f32.mrb[0].mxu0
      %v1405 = vadd.f32 %v1192, %v1404
      %v1406 = vpop.f32.mrb[0].mxu0
      %1407 = vdwg.mxu0
      %v1408 = vmax.f32 %v1282, 0.0
      %v1409 = vmax.f32 %v1285, 0.0
      %v1410 = vmax.f32 %v1290, 0.0
      %v1411 = vmax.f32 %v1293, 0.0
      %v1412 = vmax.f32 %v1298, 0.0
      %v1413 = vmax.f32 %v1301, 0.0
      %v1414 = vmax.f32 %v1306, 0.0
      %v1415 = vmax.f32 %v1309, 0.0
      %v1416 = vmax.f32 %v1314, 0.0
      %v1417 = vmax.f32 %v1317, 0.0
      %v1418 = vmax.f32 %v1322, 0.0
      %v1419 = vmax.f32 %v1325, 0.0
      %v1420 = vmax.f32 %v1330, 0.0
      %v1421 = vmax.f32 %v1333, 0.0
      %v1422 = vmax.f32 %v1338, 0.0
      %v1423 = vmax.f32 %v1341, 0.0
      %v1424 = vmax.f32 %v1346, 0.0
      %v1425 = vmax.f32 %v1349, 0.0
      %v1426 = vmax.f32 %v1354, 0.0
      %v1427 = vmax.f32 %v1357, 0.0
      %v1428 = vmax.f32 %v1362, 0.0
      %v1429 = vmax.f32 %v1365, 0.0
      %v1430 = vmax.f32 %v1370, 0.0
      %v1431 = vmax.f32 %v1373, 0.0
      %v1432 = vmax.f32 %v1378, 0.0
      %v1433 = vmax.f32 %v1381, 0.0
      %v1434 = vmax.f32 %v1386, 0.0
      %v1435 = vmax.f32 %v1389, 0.0
      %v1436 = vmax.f32 %v1394, 0.0
      %v1437 = vmax.f32 %v1397, 0.0
      %v1438 = vmax.f32 %v1402, 0.0
      %v1439 = vmax.f32 %v1405, 0.0
      %vm1440 = vcmask 130048
      %1441 = vst.msk [vmem:[%s224] sm:$0xff] %vm1440, %v1408
      %1442 = vst.msk [vmem:[%s224 + $0x8] sm:$0xff] %vm1440, %v1409
      %1443 = vst.msk [vmem:[%s224 + $0x10] sm:$0xff] %vm1440, %v1410
      %1444 = vst.msk [vmem:[%s224 + $0x18] sm:$0xff] %vm1440, %v1411
      %1445 = vst.msk [vmem:[%s224 + $0x20] sm:$0xff] %vm1440, %v1412
      %1446 = vst.msk [vmem:[%s224 + $0x28] sm:$0xff] %vm1440, %v1413
      %1447 = vst.msk [vmem:[%s224 + $0x30] sm:$0xff] %vm1440, %v1414
      %1448 = vst.msk [vmem:[%s224 + $0x38] sm:$0xff] %vm1440, %v1415
      %1449 = vst.msk [vmem:[%s224 + $0x40] sm:$0xff] %vm1440, %v1416
      %1450 = vst.msk [vmem:[%s224 + $0x48] sm:$0xff] %vm1440, %v1417
      %1451 = vst.msk [vmem:[%s224 + $0x50] sm:$0xff] %vm1440, %v1418
      %1452 = vst.msk [vmem:[%s224 + $0x58] sm:$0xff] %vm1440, %v1419
      %1453 = vst.msk [vmem:[%s224 + $0x60] sm:$0xff] %vm1440, %v1420
      %1454 = vst.msk [vmem:[%s224 + $0x68] sm:$0xff] %vm1440, %v1421
      %1455 = vst.msk [vmem:[%s224 + $0x70] sm:$0xff] %vm1440, %v1422
      %1456 = vst.msk [vmem:[%s224 + $0x78] sm:$0xff] %vm1440, %v1423
      %1457 = vst.msk [vmem:[%s224 + $0x80] sm:$0xff] %vm1440, %v1424
      %1458 = vst.msk [vmem:[%s224 + $0x88] sm:$0xff] %vm1440, %v1425
      %1459 = vst.msk [vmem:[%s224 + $0x90] sm:$0xff] %vm1440, %v1426
      %1460 = vst.msk [vmem:[%s224 + $0x98] sm:$0xff] %vm1440, %v1427
      %1461 = vst.msk [vmem:[%s224 + $0xa0] sm:$0xff] %vm1440, %v1428
      %1462 = vst.msk [vmem:[%s224 + $0xa8] sm:$0xff] %vm1440, %v1429
      %1463 = vst.msk [vmem:[%s224 + $0xb0] sm:$0xff] %vm1440, %v1430
      %1464 = vst.msk [vmem:[%s224 + $0xb8] sm:$0xff] %vm1440, %v1431
      %1465 = vst.msk [vmem:[%s224 + $0xc0] sm:$0xff] %vm1440, %v1432
      %1466 = vst.msk [vmem:[%s224 + $0xc8] sm:$0xff] %vm1440, %v1433
      %1467 = vst.msk [vmem:[%s224 + $0xd0] sm:$0xff] %vm1440, %v1434
      %1468 = vst.msk [vmem:[%s224 + $0xd8] sm:$0xff] %vm1440, %v1435
      %1469 = vst.msk [vmem:[%s224 + $0xe0] sm:$0xff] %vm1440, %v1436
      %1470 = vst.msk [vmem:[%s224 + $0xe8] sm:$0xff] %vm1440, %v1437
      %1471 = vst.msk [vmem:[%s224 + $0xf0] sm:$0xff] %vm1440, %v1438
      %1472 = vst.msk [vmem:[%s224 + $0xf8] sm:$0xff] %vm1440, %v1439
      %p1473 = scmp.lt.s32.totalorder %s16, 1
      %s1474 = scalar_select %p1473, %s16, 1
      %s1475 = smul.addr %s1474, 32
      %s1476 = smul.addr %s1475, 8
      %s1477 = scalar_lea.vmem %s5, %s1476
      // Predicated region
      $region41: #{mobile_block_forward.1} parent=39 // pred_check
        %p1478 = pneg %p144
      $region42: #{mobile_block_forward.1} parent=39 // pred_check_branch
        %1480 = sbr.rel (%p1478) target = $region44
      $region43: #{mobile_block_forward.1} parent=39 // pred_region
        _
      $region44: #{mobile_block_forward.1} parent=39 // pred_fallthru
        _
    $region40: #{mobile_block_forward.1} parent=5 // pred_fallthru
      _
    %p1481 = scmp.le.s32.totalorder 2, %s11
    // Predicated region
    $region45: #{mobile_block_forward.1} parent=5 // pred_check
      %p1482 = pneg %p1481
    $region46: #{mobile_block_forward.1} parent=5 // pred_check_branch
      %1484 = sbr.rel (%p1482) target = $region48
    $region47: #{mobile_block_forward.1} parent=5 // pred_region
      %s1485 = ssub.s32 %s11, 2
      // Predicated region
      $region49: #{mobile_block_forward.1} parent=47 // pred_check
        %p1486 = pneg %p150
      $region50: #{mobile_block_forward.1} parent=47 // pred_check_branch
        %1488 = sbr.rel (%p1486) target = $region52
      $region51: #{mobile_block_forward.1} parent=47 // pred_region
        %p1489 = scmp.lt.s32.totalorder %s17, 1
        %s1490 = scalar_select %p1489, %s17, 1
        %s1491 = smul.addr %s1490, 32
        %s1492 = smul.addr %s1491, 8
        %s1493 = scalar_lea.vmem %s5, %s1492
      $region52: #{mobile_block_forward.1} parent=47 // pred_fallthru
        _
    $region48: #{mobile_block_forward.1} parent=5 // pred_fallthru
      _
  $region6: #{mobile_block_forward.1} parent=0 // loop_footer
    %s15 = sadd.s32 1, %s11
  $region7: #{mobile_block_forward.1} parent=0 // loop_footer_branch
    %10 = sbr.rel target = $region3
  $region8: #{mobile_block_forward.1} parent=0 // loop_exit
    _

</llo_original>
